<compile_context>
chip_gen: v6e
topology: v6e:2x2x1
jax: 0.10.0
libtpu: 0.0.40
codegen_flags: <defaults>
</compile_context>

<pallas_src>
import jax
import jax.numpy as jnp
from jax import lax
from jax.experimental import pallas as pl
from jax.experimental.pallas import tpu as pltpu


# MXU operand precision: bf16 operands + f32 accumulation (~2-3x MXU
# throughput on v5e/v6e/v7x).  Set to jnp.float32 to restore exact f32 math.
MATMUL_DTYPE = jnp.bfloat16

# Conservative per-step VMEM budget for tile selection (v7x has 64 MiB
# physical VMEM / 32 MiB scoped default -- half of v5e/v6e).
_VMEM_BUDGET_BYTES = 24 << 20


# ----------------------------- kernel ---------------------------------------


def basic_block_kernel(x_ref, wb1_ref, b1_ref, wb2_ref, b2_ref, o_ref):
    """One grid step == one batch tile (BT images), lane-packed NHWC.

    x_ref   : (BT, H, W*C) f32   packed input (also the residual)
    wb1_ref : (3*W*C, W*P) bf16  banded per-H-tap weights for conv1 (BN1 scale folded)
    b1_ref  : (1, W*P)     f32   BN1 shift, tiled over W
    wb2_ref : (3*W*P, W*P) bf16  banded per-H-tap weights for conv2 (BN2 scale folded)
    b2_ref  : (1, W*P)     f32   BN2 shift
    o_ref   : (BT, H, W*P) f32   packed output
    """
    BT, H, WC = x_ref.shape
    WP = o_ref.shape[2]
    M = BT * H
    cdt = wb1_ref.dtype                       # matmul operand dtype (bf16)

    # h-index of every flattened row, built once and reused by both convs.
    # Used to zero the padding=1 H-halo contributions after the rolls
    # (including the cyclic wrap of the roll and cross-image rows).
    h_row = lax.broadcasted_iota(jnp.int32, (BT, H, WP), 1).reshape(M, WP)
    not_top = h_row != 0
    not_bot = h_row != H - 1

    def conv3x3(inp, wb_ref):
        # inp: (M, L) matmul-ready activations; wb_ref: (3*L, WP) banded
        # per-H-tap weights.  One MXU matmul per H tap (K = L); W-direction
        # taps/padding are the zero bands of wb.  The H-direction halo is
        # handled with XLU sublane rolls + row masks (no padded scratch,
        # no im2col concatenate).
        L = inp.shape[1]
        y0 = jnp.dot(inp, wb_ref[pl.ds(0, L), :],
                     preferred_element_type=jnp.float32)
        y1 = jnp.dot(inp, wb_ref[pl.ds(L, L), :],
                     preferred_element_type=jnp.float32)
        y2 = jnp.dot(inp, wb_ref[pl.ds(2 * L, L), :],
                     preferred_element_type=jnp.float32)
        # out[r] = y0[r-1] + y1[r] + y2[r+1], boundary rows zeroed.
        y0 = jnp.where(not_top, pltpu.roll(y0, shift=1, axis=0), 0.0)
        y2 = jnp.where(not_bot, pltpu.roll(y2, shift=M - 1, axis=0), 0.0)
        return y0 + y1 + y2                                    # (M, WP) f32

    x = x_ref[...].reshape(M, WC)                              # f32 residual

    # ---- conv1 (BN1 scale folded into wb1) + BN1 shift + relu ----
    y = conv3x3(x.astype(cdt), wb1_ref)
    y = jnp.maximum(y + b1_ref[...], 0.0)

    # ---- conv2 (BN2 scale folded into wb2) + BN2 shift + residual + relu ----
    z = conv3x3(y.astype(cdt), wb2_ref)
    z = z + b2_ref[...] + x
    o_ref[...] = jnp.maximum(z, 0.0).reshape(BT, H, WP).astype(o_ref.dtype)


# ------------------------- host-side preparation ----------------------------


def _banded_conv_weight(w, width):
    """Fold a 3x3 conv (OIHW) into 3 stacked banded matrices, one per H tap.

    Returns WB of shape (3*width*C, width*P) with
      WB[dh*width*C + w_in*C + c, w_out*P + p] = w[p, c, dh, w_in - w_out + 1]
    when 0 <= w_in - w_out + 1 < 3 and 0 otherwise (the zero bands implement
    the W-direction `padding=1`).  H taps are separate row blocks so the
    kernel runs one matmul per tap and combines them with sublane rolls.
    """
    P, C, KH, KW = w.shape
    wt = jnp.transpose(w, (2, 3, 1, 0)).astype(jnp.float32)    # [dh, dw, c, p]
    w_in = jnp.arange(width)
    w_out = jnp.arange(width)
    dw = w_in[:, None] - w_out[None, :] + 1                    # (W, W) tap index
    valid = (dw >= 0) & (dw < KW)
    dw_c = jnp.clip(dw, 0, KW - 1)
    blocks = []
    for dh in range(KH):
        g = jnp.take(wt[dh], dw_c, axis=0)                     # (W, W, C, P)
        g = jnp.where(valid[:, :, None, None], g, 0.0)
        g = jnp.transpose(g, (0, 2, 1, 3))                     # [w_in, c, w_out, p]
        blocks.append(g.reshape(width * C, width * P))
    return jnp.concatenate(blocks, axis=0)                     # (3*W*C, W*P)


def fold_basic_block_params(w1, g1, be1, m1, v1, w2, g2, be2, m2, v2,
                            width, eps=1e-5):
    """Banded conv weights with BN scale folded in (bf16) + f32 BN shifts."""
    P = w1.shape[0]
    inv1 = g1 / jnp.sqrt(v1 + eps)
    inv2 = g2 / jnp.sqrt(v2 + eps)
    wb1 = (_banded_conv_weight(w1, width) * jnp.tile(inv1, width)[None, :])
    wb2 = (_banded_conv_weight(w2, width) * jnp.tile(inv2, width)[None, :])
    wb1 = wb1.astype(MATMUL_DTYPE)
    wb2 = wb2.astype(MATMUL_DTYPE)
    b1 = jnp.tile(be1 - m1 * inv1, width).reshape(1, width * P).astype(jnp.float32)
    b2 = jnp.tile(be2 - m2 * inv2, width).reshape(1, width * P).astype(jnp.float32)
    return wb1, b1, wb2, b2


def _vmem_bytes(bt, H, WC, WP):
    """Rough per-step VMEM footprint (double-buffered I/O + weights + temps)."""
    io = 2 * bt * H * (WC + WP) * 4                 # x / out blocks, double-buffered
    wts = 2 * (3 * WC * WP + 3 * WP * WP) * 4 + 2 * 2 * WP * 4
    tmp = bt * H * (2 * (WC + WP) + 10 * WP * 4)    # bf16 copies + f32 partials/masks
    return io + wts + tmp


def _pick_bt(N, H, WC, WP, budget=_VMEM_BUDGET_BYTES):
    """Batch tile: fill the MXU M dimension, keep >=2 grid steps, fit VMEM."""
    divs = [b for b in range(1, N + 1) if N % b == 0]
    fit = [b for b in divs if _vmem_bytes(b, H, WC, WP) <= budget] or [1]

    def score(b):
        m, steps = b * H, N // b
        return (m >= 256 and steps >= 2,   # fills v6e/v7x MXU rows + 2 TC steps
                m >= 128 and steps >= 2,   # fills v5e MXU rows + 2 TC steps
                m >= 256,
                m >= 128,
                steps >= 2,
                -m)                        # smallest tile that satisfies the above

    return max(fit, key=score)


# ------------------------------ wrappers -------------------------------------


def basic_block_forward_packed(x_packed, wb1, b1, wb2, b2):
    """Run the block on lane-packed activations: (N, H, W*C) -> (N, H, W*P).

    Use this entry point when chaining residual blocks to avoid per-block
    NCHW<->packed layout round-trips through HBM.
    """
    N, H, WC = x_packed.shape
    WP = wb1.shape[1]
    assert wb1.shape[0] == 3 * WC and wb2.shape == (3 * WP, WP)
    assert WP == WC  # stride=1 / no downsample => residual needs inplanes == planes

    BT = _pick_bt(N, H, WC, WP)
    vmem_limit = int(min(48 << 20,
                         max(32 << 20, 2 * _vmem_bytes(BT, H, WC, WP))))

    return pl.pallas_call(
        basic_block_kernel,
        out_shape=jax.ShapeDtypeStruct((N, H, WP), jnp.float32),
        grid=(N // BT,),
        in_specs=[
            pl.BlockSpec((BT, H, WC), lambda b: (b, 0, 0)),
            # Grid-invariant operands: constant index_map => DMA'd once.
            # TODO(synk): single-buffer these (pipeline_mode=pl.Buffered(1))
            # to halve their VMEM footprint at realistic widths on v7x.
            pl.BlockSpec((3 * WC, WP), lambda b: (0, 0)),
            pl.BlockSpec((1, WP), lambda b: (0, 0)),
            pl.BlockSpec((3 * WP, WP), lambda b: (0, 0)),
            pl.BlockSpec((1, WP), lambda b: (0, 0)),
        ],
        out_specs=pl.BlockSpec((BT, H, WP), lambda b: (b, 0, 0)),
        compiler_params=pltpu.CompilerParams(
            dimension_semantics=("parallel",),
            vmem_limit_bytes=vmem_limit),
    )(x_packed, wb1, b1, wb2, b2)


@jax.jit
def basic_block_forward(x_nchw, w1, g1, be1, m1, v1, w2, g2, be2, m2, v2,
                        eps=1e-5):
    """BasicBlock forward (eval mode), NCHW in / NCHW out, stride=1, no downsample.

    NOTE: the NCHW<->packed transposes below are a full HBM round-trip each;
    chained blocks should stay in the packed layout and call
    `basic_block_forward_packed` directly.
    """
    N, Cin, H, W = x_nchw.shape
    P = w1.shape[0]
    assert P == Cin and w1.shape == (P, Cin, 3, 3) and w2.shape == (P, P, 3, 3)

    wb1, b1, wb2, b2 = fold_basic_block_params(
        w1, g1, be1, m1, v1, w2, g2, be2, m2, v2, W, eps)

    x_packed = jnp.transpose(x_nchw, (0, 2, 3, 1)).astype(jnp.float32)
    x_packed = x_packed.reshape(N, H, W * Cin)

    out_packed = basic_block_forward_packed(x_packed, wb1, b1, wb2, b2)

    out = out_packed.reshape(N, H, W, P)
    return jnp.transpose(out, (0, 3, 1, 2))


# ------------------------------ reference ------------------------------------


def reference_forward(x, w1, g1, be1, m1, v1, w2, g2, be2, m2, v2, eps=1e-5):
    """Pure-JAX NCHW reference (mirrors the PyTorch module in eval mode)."""
    dn = ("NCHW", "OIHW", "NCHW")

    def bn(o, g, be, m, v):
        return (o - m[None, :, None, None]) / jnp.sqrt(v[None, :, None, None] + eps) \
               * g[None, :, None, None] + be[None, :, None, None]

    out = lax.conv_general_dilated(x, w1, (1, 1), ((1, 1), (1, 1)),
                                   dimension_numbers=dn)
    out = jnp.maximum(bn(out, g1, be1, m1, v1), 0.0)
    out = lax.conv_general_dilated(out, w2, (1, 1), ((1, 1), (1, 1)),
                                   dimension_numbers=dn)
    out = bn(out, g2, be2, m2, v2) + x
    return jnp.maximum(out, 0.0)


if __name__ == "__main__":
    # Demo shapes: inplanes=planes=8, 16x16 spatial => W*C = 128 (lane-dense);
    # batch=32 so the per-step matmul has M = BT*H = 256 rows (fills the
    # v6e/v7x MXU) with 2 "parallel" grid steps for v7x's two TensorCores.
    N, C, H, W = 32, 8, 16, 16
    P = C

    key = jax.random.PRNGKey(0)
    keys = jax.random.split(key, 12)

    x = jax.random.normal(keys[0], (N, C, H, W), jnp.float32)

    w1 = jax.random.normal(keys[1], (P, C, 3, 3), jnp.float32) * 0.1
    w2 = jax.random.normal(keys[2], (P, P, 3, 3), jnp.float32) * 0.1

    g1 = 1.0 + 0.1 * jax.random.normal(keys[3], (P,), jnp.float32)
    be1 = 0.05 * jax.random.normal(keys[4], (P,), jnp.float32)
    m1 = 0.1 * jax.random.normal(keys[5], (P,), jnp.float32)
    v1 = 0.5 + jnp.abs(jax.random.normal(keys[6], (P,), jnp.float32)) * 0.2

    g2 = 1.0 + 0.1 * jax.random.normal(keys[7], (P,), jnp.float32)
    be2 = 0.05 * jax.random.normal(keys[8], (P,), jnp.float32)
    m2 = 0.1 * jax.random.normal(keys[9], (P,), jnp.float32)
    v2 = 0.5 + jnp.abs(jax.random.normal(keys[10], (P,), jnp.float32)) * 0.2

    out = basic_block_forward(x, w1, g1, be1, m1, v1, w2, g2, be2, m2, v2)
    out = jax.block_until_ready(out)

    ref = reference_forward(x, w1, g1, be1, m1, v1, w2, g2, be2, m2, v2)
    ref = jax.block_until_ready(ref)

    assert out.shape == (N, C, H, W)
    # bf16 MXU operands (f32 accumulation) vs. the pure-f32 reference: allow
    # a few 1e-2 of absolute/relative mismatch.
    assert jnp.allclose(out, ref, rtol=2e-2, atol=2e-2), (
        float(jnp.max(jnp.abs(out - ref))))
    print("KERNEL_OK")
</pallas_src>

<mosaic_0001>
module attributes {stable_mosaic.version = 11 : i64} {
  func.func @basic_block_kernel(%arg0: i32, %arg1: memref<16x16x128xf32, #tpu.memory_space<vmem>>, %arg2: memref<384x128xbf16, #tpu.memory_space<vmem>>, %arg3: memref<1x128xf32, #tpu.memory_space<vmem>>, %arg4: memref<384x128xbf16, #tpu.memory_space<vmem>>, %arg5: memref<1x128xf32, #tpu.memory_space<vmem>>, %arg6: memref<16x16x128xf32, #tpu.memory_space<vmem>>) attributes {dimension_semantics = [#tpu.dimension_semantics<parallel>], iteration_bounds = array<i64: 2>, scalar_prefetch = 0 : i64, scratch_operands = 0 : i64, tpu.core_type = #tpu.core_type<tc>, window_params = [{transform_indices = @transform_0, window_bounds = array<i64: 16, 16, 128>}, {pipeline_mode = #tpu.pipeline_mode<synchronous>, transform_indices = @transform_1, window_bounds = array<i64: 384, 128>}, {pipeline_mode = #tpu.pipeline_mode<synchronous>, transform_indices = @transform_2, window_bounds = array<i64: 1, 128>}, {pipeline_mode = #tpu.pipeline_mode<synchronous>, transform_indices = @transform_3, window_bounds = array<i64: 384, 128>}, {pipeline_mode = #tpu.pipeline_mode<synchronous>, transform_indices = @transform_4, window_bounds = array<i64: 1, 128>}, {transform_indices = @transform_5, window_bounds = array<i64: 16, 16, 128>}]} {
    %0 = tpu.iota {dimensions = array<i32: 1>} : vector<16x16x128xi32>
    %1 = vector.shape_cast %0 : vector<16x16x128xi32> to vector<256x128xi32>
    %c0_i32 = arith.constant 0 : i32
    %2 = vector.broadcast %c0_i32 : i32 to vector<256x128xi32>
    %3 = arith.cmpi ne, %1, %2 : vector<256x128xi32>
    %c15_i32 = arith.constant 15 : i32
    %4 = vector.broadcast %c15_i32 : i32 to vector<256x128xi32>
    %5 = arith.cmpi ne, %1, %4 : vector<256x128xi32>
    %c0 = arith.constant 0 : index
    %c0_0 = arith.constant 0 : index
    %c0_1 = arith.constant 0 : index
    %6 = vector.load %arg1[%c0, %c0_0, %c0_1] : memref<16x16x128xf32, #tpu.memory_space<vmem>>, vector<16x16x128xf32>
    %7 = vector.shape_cast %6 : vector<16x16x128xf32> to vector<256x128xf32>
    %8 = arith.truncf %7 : vector<256x128xf32> to vector<256x128xbf16>
    %c0_2 = arith.constant 0 : index
    %c0_3 = arith.constant 0 : index
    %9 = vector.load %arg2[%c0_2, %c0_3] : memref<384x128xbf16, #tpu.memory_space<vmem>>, vector<128x128xbf16>
    %cst = arith.constant dense<0.000000e+00> : vector<256x128xf32>
    %10 = tpu.matmul %8, %9, %cst {dimension_numbers = #tpu.dot_dimension_numbers<[1], [0], [0], [1], [0, 0, 1, 1], [], []>} : vector<256x128xbf16>, vector<128x128xbf16>, vector<256x128xf32> -> vector<256x128xf32>
    %c128 = arith.constant 128 : index
    %c0_4 = arith.constant 0 : index
    %11 = vector.load %arg2[%c128, %c0_4] : memref<384x128xbf16, #tpu.memory_space<vmem>>, vector<128x128xbf16>
    %cst_5 = arith.constant dense<0.000000e+00> : vector<256x128xf32>
    %12 = tpu.matmul %8, %11, %cst_5 {dimension_numbers = #tpu.dot_dimension_numbers<[1], [0], [0], [1], [0, 0, 1, 1], [], []>} : vector<256x128xbf16>, vector<128x128xbf16>, vector<256x128xf32> -> vector<256x128xf32>
    %c256 = arith.constant 256 : index
    %c0_6 = arith.constant 0 : index
    %13 = vector.load %arg2[%c256, %c0_6] : memref<384x128xbf16, #tpu.memory_space<vmem>>, vector<128x128xbf16>
    %cst_7 = arith.constant dense<0.000000e+00> : vector<256x128xf32>
    %14 = tpu.matmul %8, %13, %cst_7 {dimension_numbers = #tpu.dot_dimension_numbers<[1], [0], [0], [1], [0, 0, 1, 1], [], []>} : vector<256x128xbf16>, vector<128x128xbf16>, vector<256x128xf32> -> vector<256x128xf32>
    %c1_i32 = arith.constant 1 : i32
    %15 = tpu.dynamic_rotate %10 by %c1_i32 dim 0 : vector<256x128xf32>, i32 -> vector<256x128xf32>
    %cst_8 = arith.constant 0.000000e+00 : f32
    %16 = vector.broadcast %cst_8 : f32 to vector<256x128xf32>
    %17 = arith.select %3, %15, %16 : vector<256x128xi1>, vector<256x128xf32>
    %c255_i32 = arith.constant 255 : i32
    %18 = tpu.dynamic_rotate %14 by %c255_i32 dim 0 : vector<256x128xf32>, i32 -> vector<256x128xf32>
    %cst_9 = arith.constant 0.000000e+00 : f32
    %19 = vector.broadcast %cst_9 : f32 to vector<256x128xf32>
    %20 = arith.select %5, %18, %19 : vector<256x128xi1>, vector<256x128xf32>
    %21 = arith.addf %17, %12 : vector<256x128xf32>
    %22 = arith.addf %21, %20 : vector<256x128xf32>
    %c0_10 = arith.constant 0 : index
    %c0_11 = arith.constant 0 : index
    %23 = vector.load %arg3[%c0_10, %c0_11] : memref<1x128xf32, #tpu.memory_space<vmem>>, vector<1x128xf32>
    %24 = vector.broadcast %23 : vector<1x128xf32> to vector<256x128xf32>
    %25 = arith.addf %22, %24 : vector<256x128xf32>
    %cst_12 = arith.constant 0.000000e+00 : f32
    %26 = vector.broadcast %cst_12 : f32 to vector<256x128xf32>
    %27 = arith.maximumf %25, %26 : vector<256x128xf32>
    %28 = arith.truncf %27 : vector<256x128xf32> to vector<256x128xbf16>
    %c0_13 = arith.constant 0 : index
    %c0_14 = arith.constant 0 : index
    %29 = vector.load %arg4[%c0_13, %c0_14] : memref<384x128xbf16, #tpu.memory_space<vmem>>, vector<128x128xbf16>
    %cst_15 = arith.constant dense<0.000000e+00> : vector<256x128xf32>
    %30 = tpu.matmul %28, %29, %cst_15 {dimension_numbers = #tpu.dot_dimension_numbers<[1], [0], [0], [1], [0, 0, 1, 1], [], []>} : vector<256x128xbf16>, vector<128x128xbf16>, vector<256x128xf32> -> vector<256x128xf32>
    %c128_16 = arith.constant 128 : index
    %c0_17 = arith.constant 0 : index
    %31 = vector.load %arg4[%c128_16, %c0_17] : memref<384x128xbf16, #tpu.memory_space<vmem>>, vector<128x128xbf16>
    %cst_18 = arith.constant dense<0.000000e+00> : vector<256x128xf32>
    %32 = tpu.matmul %28, %31, %cst_18 {dimension_numbers = #tpu.dot_dimension_numbers<[1], [0], [0], [1], [0, 0, 1, 1], [], []>} : vector<256x128xbf16>, vector<128x128xbf16>, vector<256x128xf32> -> vector<256x128xf32>
    %c256_19 = arith.constant 256 : index
    %c0_20 = arith.constant 0 : index
    %33 = vector.load %arg4[%c256_19, %c0_20] : memref<384x128xbf16, #tpu.memory_space<vmem>>, vector<128x128xbf16>
    %cst_21 = arith.constant dense<0.000000e+00> : vector<256x128xf32>
    %34 = tpu.matmul %28, %33, %cst_21 {dimension_numbers = #tpu.dot_dimension_numbers<[1], [0], [0], [1], [0, 0, 1, 1], [], []>} : vector<256x128xbf16>, vector<128x128xbf16>, vector<256x128xf32> -> vector<256x128xf32>
    %c1_i32_22 = arith.constant 1 : i32
    %35 = tpu.dynamic_rotate %30 by %c1_i32_22 dim 0 : vector<256x128xf32>, i32 -> vector<256x128xf32>
    %cst_23 = arith.constant 0.000000e+00 : f32
    %36 = vector.broadcast %cst_23 : f32 to vector<256x128xf32>
    %37 = arith.select %3, %35, %36 : vector<256x128xi1>, vector<256x128xf32>
    %c255_i32_24 = arith.constant 255 : i32
    %38 = tpu.dynamic_rotate %34 by %c255_i32_24 dim 0 : vector<256x128xf32>, i32 -> vector<256x128xf32>
    %cst_25 = arith.constant 0.000000e+00 : f32
    %39 = vector.broadcast %cst_25 : f32 to vector<256x128xf32>
    %40 = arith.select %5, %38, %39 : vector<256x128xi1>, vector<256x128xf32>
    %41 = arith.addf %37, %32 : vector<256x128xf32>
    %42 = arith.addf %41, %40 : vector<256x128xf32>
    %c0_26 = arith.constant 0 : index
    %c0_27 = arith.constant 0 : index
    %43 = vector.load %arg5[%c0_26, %c0_27] : memref<1x128xf32, #tpu.memory_space<vmem>>, vector<1x128xf32>
    %44 = vector.broadcast %43 : vector<1x128xf32> to vector<256x128xf32>
    %45 = arith.addf %42, %44 : vector<256x128xf32>
    %46 = arith.addf %45, %7 : vector<256x128xf32>
    %cst_28 = arith.constant 0.000000e+00 : f32
    %47 = vector.broadcast %cst_28 : f32 to vector<256x128xf32>
    %48 = arith.maximumf %46, %47 : vector<256x128xf32>
    %49 = vector.shape_cast %48 : vector<256x128xf32> to vector<16x16x128xf32>
    %c0_29 = arith.constant 0 : index
    %c0_30 = arith.constant 0 : index
    %c0_31 = arith.constant 0 : index
    %50 = vector.load %arg6[%c0_29, %c0_30, %c0_31] : memref<16x16x128xf32, #tpu.memory_space<vmem>>, vector<16x16x128xf32>
    tpu.vector_store %arg6[%c0_29, %c0_30, %c0_31], %49 {strides = array<i32>} : memref<16x16x128xf32, #tpu.memory_space<vmem>>, vector<16x16x128xf32>,
    return
  }
  func.func @transform_0(%arg0: i32) -> (i32, i32, i32) {
    %c0_i32 = arith.constant 0 : i32
    %c0_i32_0 = arith.constant 0 : i32
    %c0_i32_1 = arith.constant 0 : i32
    return %arg0, %c0_i32, %c0_i32_0 : i32, i32, i32
  }
  func.func @transform_1(%arg0: i32) -> (i32, i32) {
    %c0_i32 = arith.constant 0 : i32
    %c0_i32_0 = arith.constant 0 : i32
    %c0_i32_1 = arith.constant 0 : i32
    return %c0_i32, %c0_i32_0 : i32, i32
  }
  func.func @transform_2(%arg0: i32) -> (i32, i32) {
    %c0_i32 = arith.constant 0 : i32
    %c0_i32_0 = arith.constant 0 : i32
    %c0_i32_1 = arith.constant 0 : i32
    return %c0_i32, %c0_i32_0 : i32, i32
  }
  func.func @transform_3(%arg0: i32) -> (i32, i32) {
    %c0_i32 = arith.constant 0 : i32
    %c0_i32_0 = arith.constant 0 : i32
    %c0_i32_1 = arith.constant 0 : i32
    return %c0_i32, %c0_i32_0 : i32, i32
  }
  func.func @transform_4(%arg0: i32) -> (i32, i32) {
    %c0_i32 = arith.constant 0 : i32
    %c0_i32_0 = arith.constant 0 : i32
    %c0_i32_1 = arith.constant 0 : i32
    return %c0_i32, %c0_i32_0 : i32, i32
  }
  func.func @transform_5(%arg0: i32) -> (i32, i32, i32) {
    %c0_i32 = arith.constant 0 : i32
    %c0_i32_0 = arith.constant 0 : i32
    %c0_i32_1 = arith.constant 0 : i32
    return %arg0, %c0_i32, %c0_i32_0 : i32, i32, i32
  }
}

</mosaic_0001>

<llo_original>
// kernel: tile.28
$region0: #{tile.28}
  #allocation0 [shape = 's32[1]{0}', space=sflag, size = 0x4, scoped, tag = 'scoped memory for tile.28']
  %s0 = inlined_call_operand.vmem [shape: f32[8], index: 0, kind: input, shape index: {}]
  %s1 = inlined_call_operand.vmem [shape: f32[16,8], index: 1, kind: output, shape index: {}]
  // Predicated region
  $region2: #{tile.28} parent=0 // pred_check
    _
  $region3: #{tile.28} parent=0 // pred_check_branch
    %3 = sbr.rel (0) target = $region5
  $region4: #{tile.28} parent=0 // pred_region
    _
  $region5: #{tile.28} parent=0 // pred_fallthru
    _
  %v4 = vld [vmem:[%s0] ss:$0 sm:$0xff]
  %5 = vst [vmem:[%s1] sm:$0xff] %v4
  %s6 = scalar_lea.vmem %s1, 8
  %7 = vst [vmem:[%s6] sm:$0xff] %v4

// kernel: mul.15
$region0: #{mul.15}
  %s0 = inlined_call_operand.vmem [shape: f32[16,8], index: 0, kind: input, shape index: {}]
  %s1 = inlined_call_operand.vmem [shape: f32[128], index: 1, kind: output, shape index: {}]
  $region1: #{mul.15} parent=0
    #allocation0 [shape = 'u8[4096]{0}', space=vmem, size = 0x1000, scoped, tag = 'scoped mem for output reshape']
    %v2 = vld [vmem:[%s0] sm:$0x1]
    %vm3 = vcmask 64512
    %4 = vst.msk [vmem:[#allocation0] sm:$0x1] %vm3, %v2
    %s5 = scalar_lea.vmem %s0, 15
    %v6 = vld [vmem:[%s5] sm:$0x1]
    %7 = vrot.lane.b32.xlu0 %v6, 120
    %v8 = vpop.permute.xlu0 %7
    %vm9 = vcmask 1048512
    %10 = vst.msk [vmem:[#allocation0] sm:$0x1] %vm9, %v8
    %s11 = scalar_lea.vmem %s0, 14
    %v12 = vld [vmem:[%s11] sm:$0x1]
    %13 = vrot.lane.b32.xlu0 %v12, 112
    %v14 = vpop.permute.xlu0 %13
    %vm15 = vcmask 982912
    %16 = vst.msk [vmem:[#allocation0] sm:$0x1] %vm15, %v14
    %s17 = scalar_lea.vmem %s0, 13
    %v18 = vld [vmem:[%s17] sm:$0x1]
    %19 = vrot.lane.b32.xlu0 %v18, 104
    %v20 = vpop.permute.xlu0 %19
    %vm21 = vcmask 917312
    %22 = vst.msk [vmem:[#allocation0] sm:$0x1] %vm21, %v20
    %s23 = scalar_lea.vmem %s0, 12
    %v24 = vld [vmem:[%s23] sm:$0x1]
    %25 = vrot.lane.b32.xlu0 %v24, 96
    %v26 = vpop.permute.xlu0 %25
    %vm27 = vcmask 851712
    %28 = vst.msk [vmem:[#allocation0] sm:$0x1] %vm27, %v26
    %s29 = scalar_lea.vmem %s0, 11
    %v30 = vld [vmem:[%s29] sm:$0x1]
    %31 = vrot.lane.b32.xlu0 %v30, 88
    %v32 = vpop.permute.xlu0 %31
    %vm33 = vcmask 786112
    %34 = vst.msk [vmem:[#allocation0] sm:$0x1] %vm33, %v32
    %s35 = scalar_lea.vmem %s0, 10
    %v36 = vld [vmem:[%s35] sm:$0x1]
    %37 = vrot.lane.b32.xlu0 %v36, 80
    %v38 = vpop.permute.xlu0 %37
    %vm39 = vcmask 720512
    %40 = vst.msk [vmem:[#allocation0] sm:$0x1] %vm39, %v38
    %s41 = scalar_lea.vmem %s0, 9
    %v42 = vld [vmem:[%s41] sm:$0x1]
    %43 = vrot.lane.b32.xlu0 %v42, 72
    %v44 = vpop.permute.xlu0 %43
    %vm45 = vcmask 654912
    %46 = vst.msk [vmem:[#allocation0] sm:$0x1] %vm45, %v44
    %s47 = scalar_lea.vmem %s0, 8
    %v48 = vld [vmem:[%s47] sm:$0x1]
    %49 = vrot.lane.b32.xlu0 %v48, 64
    %v50 = vpop.permute.xlu0 %49
    %vm51 = vcmask 589312
    %52 = vst.msk [vmem:[#allocation0] sm:$0x1] %vm51, %v50
    %s53 = scalar_lea.vmem %s0, 7
    %v54 = vld [vmem:[%s53] sm:$0x1]
    %55 = vrot.lane.b32.xlu0 %v54, 56
    %v56 = vpop.permute.xlu0 %55
    %vm57 = vcmask 523712
    %58 = vst.msk [vmem:[#allocation0] sm:$0x1] %vm57, %v56
    %s59 = scalar_lea.vmem %s0, 6
    %v60 = vld [vmem:[%s59] sm:$0x1]
    %61 = vrot.lane.b32.xlu0 %v60, 48
    %v62 = vpop.permute.xlu0 %61
    %vm63 = vcmask 458112
    %64 = vst.msk [vmem:[#allocation0] sm:$0x1] %vm63, %v62
    %s65 = scalar_lea.vmem %s0, 5
    %v66 = vld [vmem:[%s65] sm:$0x1]
    %67 = vrot.lane.b32.xlu0 %v66, 40
    %v68 = vpop.permute.xlu0 %67
    %vm69 = vcmask 392512
    %70 = vst.msk [vmem:[#allocation0] sm:$0x1] %vm69, %v68
    %s71 = scalar_lea.vmem %s0, 4
    %v72 = vld [vmem:[%s71] sm:$0x1]
    %73 = vrot.lane.b32.xlu0 %v72, 32
    %v74 = vpop.permute.xlu0 %73
    %vm75 = vcmask 326912
    %76 = vst.msk [vmem:[#allocation0] sm:$0x1] %vm75, %v74
    %s77 = scalar_lea.vmem %s0, 3
    %v78 = vld [vmem:[%s77] sm:$0x1]
    %79 = vrot.lane.b32.xlu0 %v78, 24
    %v80 = vpop.permute.xlu0 %79
    %vm81 = vcmask 261312
    %82 = vst.msk [vmem:[#allocation0] sm:$0x1] %vm81, %v80
    %s83 = scalar_lea.vmem %s0, 2
    %v84 = vld [vmem:[%s83] sm:$0x1]
    %85 = vrot.lane.b32.xlu0 %v84, 16
    %v86 = vpop.permute.xlu0 %85
    %vm87 = vcmask 195712
    %88 = vst.msk [vmem:[#allocation0] sm:$0x1] %vm87, %v86
    %s89 = scalar_lea.vmem %s0, 1
    %v90 = vld [vmem:[%s89] sm:$0x1]
    %91 = vrot.lane.b32.xlu0 %v90, 8
    %v92 = vpop.permute.xlu0 %91
    %vm93 = vcmask 130112
    %94 = vst.msk [vmem:[#allocation0] sm:$0x1] %vm93, %v92
    %s96 = sshll.u32 1, 1
    %s97 = ssub.s32 %s96, 1
    %v99 = vld [vmem:[#allocation0] sm:%s97]
    %s100 = sshll.u32 1, 1
    %s101 = ssub.s32 %s100, 1
    %102 = vst [vmem:[%s1] sm:%s101] %v99

// kernel: tile.34
$region0: #{tile.34}
  %s0 = inlined_call_operand.vmem [shape: f32[16,8], index: 0, kind: input, shape index: {}]
  %s1 = inlined_call_operand.vmem [shape: f32[1,128], index: 1, kind: output, shape index: {}]
  $region1: #{tile.34} parent=0
    #allocation0 [shape = 'u8[4096]{0}', space=vmem, size = 0x1000, scoped, tag = 'scoped mem for output reshape']
    %v2 = vld [vmem:[%s0] sm:$0x1]
    %vm3 = vcmask 64512
    %4 = vst.msk [vmem:[#allocation0] sm:$0x1] %vm3, %v2
    %s5 = scalar_lea.vmem %s0, 15
    %v6 = vld [vmem:[%s5] sm:$0x1]
    %7 = vrot.lane.b32.xlu0 %v6, 120
    %v8 = vpop.permute.xlu0 %7
    %vm9 = vcmask 1048512
    %10 = vst.msk [vmem:[#allocation0] sm:$0x1] %vm9, %v8
    %s11 = scalar_lea.vmem %s0, 14
    %v12 = vld [vmem:[%s11] sm:$0x1]
    %13 = vrot.lane.b32.xlu0 %v12, 112
    %v14 = vpop.permute.xlu0 %13
    %vm15 = vcmask 982912
    %16 = vst.msk [vmem:[#allocation0] sm:$0x1] %vm15, %v14
    %s17 = scalar_lea.vmem %s0, 13
    %v18 = vld [vmem:[%s17] sm:$0x1]
    %19 = vrot.lane.b32.xlu0 %v18, 104
    %v20 = vpop.permute.xlu0 %19
    %vm21 = vcmask 917312
    %22 = vst.msk [vmem:[#allocation0] sm:$0x1] %vm21, %v20
    %s23 = scalar_lea.vmem %s0, 12
    %v24 = vld [vmem:[%s23] sm:$0x1]
    %25 = vrot.lane.b32.xlu0 %v24, 96
    %v26 = vpop.permute.xlu0 %25
    %vm27 = vcmask 851712
    %28 = vst.msk [vmem:[#allocation0] sm:$0x1] %vm27, %v26
    %s29 = scalar_lea.vmem %s0, 11
    %v30 = vld [vmem:[%s29] sm:$0x1]
    %31 = vrot.lane.b32.xlu0 %v30, 88
    %v32 = vpop.permute.xlu0 %31
    %vm33 = vcmask 786112
    %34 = vst.msk [vmem:[#allocation0] sm:$0x1] %vm33, %v32
    %s35 = scalar_lea.vmem %s0, 10
    %v36 = vld [vmem:[%s35] sm:$0x1]
    %37 = vrot.lane.b32.xlu0 %v36, 80
    %v38 = vpop.permute.xlu0 %37
    %vm39 = vcmask 720512
    %40 = vst.msk [vmem:[#allocation0] sm:$0x1] %vm39, %v38
    %s41 = scalar_lea.vmem %s0, 9
    %v42 = vld [vmem:[%s41] sm:$0x1]
    %43 = vrot.lane.b32.xlu0 %v42, 72
    %v44 = vpop.permute.xlu0 %43
    %vm45 = vcmask 654912
    %46 = vst.msk [vmem:[#allocation0] sm:$0x1] %vm45, %v44
    %s47 = scalar_lea.vmem %s0, 8
    %v48 = vld [vmem:[%s47] sm:$0x1]
    %49 = vrot.lane.b32.xlu0 %v48, 64
    %v50 = vpop.permute.xlu0 %49
    %vm51 = vcmask 589312
    %52 = vst.msk [vmem:[#allocation0] sm:$0x1] %vm51, %v50
    %s53 = scalar_lea.vmem %s0, 7
    %v54 = vld [vmem:[%s53] sm:$0x1]
    %55 = vrot.lane.b32.xlu0 %v54, 56
    %v56 = vpop.permute.xlu0 %55
    %vm57 = vcmask 523712
    %58 = vst.msk [vmem:[#allocation0] sm:$0x1] %vm57, %v56
    %s59 = scalar_lea.vmem %s0, 6
    %v60 = vld [vmem:[%s59] sm:$0x1]
    %61 = vrot.lane.b32.xlu0 %v60, 48
    %v62 = vpop.permute.xlu0 %61
    %vm63 = vcmask 458112
    %64 = vst.msk [vmem:[#allocation0] sm:$0x1] %vm63, %v62
    %s65 = scalar_lea.vmem %s0, 5
    %v66 = vld [vmem:[%s65] sm:$0x1]
    %67 = vrot.lane.b32.xlu0 %v66, 40
    %v68 = vpop.permute.xlu0 %67
    %vm69 = vcmask 392512
    %70 = vst.msk [vmem:[#allocation0] sm:$0x1] %vm69, %v68
    %s71 = scalar_lea.vmem %s0, 4
    %v72 = vld [vmem:[%s71] sm:$0x1]
    %73 = vrot.lane.b32.xlu0 %v72, 32
    %v74 = vpop.permute.xlu0 %73
    %vm75 = vcmask 326912
    %76 = vst.msk [vmem:[#allocation0] sm:$0x1] %vm75, %v74
    %s77 = scalar_lea.vmem %s0, 3
    %v78 = vld [vmem:[%s77] sm:$0x1]
    %79 = vrot.lane.b32.xlu0 %v78, 24
    %v80 = vpop.permute.xlu0 %79
    %vm81 = vcmask 261312
    %82 = vst.msk [vmem:[#allocation0] sm:$0x1] %vm81, %v80
    %s83 = scalar_lea.vmem %s0, 2
    %v84 = vld [vmem:[%s83] sm:$0x1]
    %85 = vrot.lane.b32.xlu0 %v84, 16
    %v86 = vpop.permute.xlu0 %85
    %vm87 = vcmask 195712
    %88 = vst.msk [vmem:[#allocation0] sm:$0x1] %vm87, %v86
    %s89 = scalar_lea.vmem %s0, 1
    %v90 = vld [vmem:[%s89] sm:$0x1]
    %91 = vrot.lane.b32.xlu0 %v90, 8
    %v92 = vpop.permute.xlu0 %91
    %vm93 = vcmask 130112
    %94 = vst.msk [vmem:[#allocation0] sm:$0x1] %vm93, %v92
    %s96 = sshll.u32 1, 1
    %s97 = ssub.s32 %s96, 1
    %v99 = vld [vmem:[#allocation0] sm:%s97]
    %s100 = sshll.u32 1, 1
    %s101 = ssub.s32 %s100, 1
    %102 = vst [vmem:[%s1] sm:%s101] %v99

// kernel: basic_block_forward.1
$region0: #{basic_block_forward.1}
  #allocation0 [shape = 'u32[]', space=smem, size = 0x4, offset = 0x4, fixed_abs, tag = 'smem constant byte address 0x4 - core index']
  #allocation1 [shape = 'u32[144,128]{1,0:T(1,128)}', space=vmem, size = 0x12000, scoped, tag = 'internal scratch']
  %s0 = inlined_call_operand.vmem [shape: f32[32,16,128], index: 0, kind: input, shape index: {}]
  %s1 = inlined_call_operand.vmem [shape: bf16[384,128], index: 1, kind: input, shape index: {}]
  %s2 = inlined_call_operand.vmem [shape: f32[1,128], index: 2, kind: input, shape index: {}]
  %s3 = inlined_call_operand.vmem [shape: bf16[384,128], index: 3, kind: input, shape index: {}]
  %s4 = inlined_call_operand.vmem [shape: f32[1,128], index: 4, kind: input, shape index: {}]
  %s5 = inlined_call_operand.vmem [shape: f32[32,16,128], index: 5, kind: output, shape index: {}]
  %s6 = sld [smem:[#allocation0]]
  $region53: #{basic_block_forward.1} parent=0
    _
  %s8 = ssub.s32 1, %s6
  %s9 = scalar_select 0, %s8, %s6
  loop: start=0, step=1, limit=4
  $region2: #{basic_block_forward.1} parent=0 // loop_pre_header
    _
  $region3: #{basic_block_forward.1} parent=0 // loop_header
    %s11 = sphi 0, %s15
    %p12 = scmp.ge.s32.totalorder %s11, 4
    %s21 = sphi 0, %s23
    %s24 = sphi 0, %s21
    %s25 = sphi 0, %s24
    %s41 = sphi 0, %s25
    %s45 = sphi 0, %s45
    %s47 = sphi 0, %s45
    %s48 = sphi 0, %s47
    %s62 = sphi 0, %s48
    %s66 = sphi 0, %s66
    %s68 = sphi 0, %s66
    %s69 = sphi 0, %s68
    %s83 = sphi 0, %s69
    %s87 = sphi 0, %s87
    %s89 = sphi 0, %s87
    %s90 = sphi 0, %s89
    %s104 = sphi 0, %s90
    %s108 = sphi 0, %s108
    %s110 = sphi 0, %s108
    %s111 = sphi 0, %s110
    %s125 = sphi 0, %s111
    %s131 = sphi 0, %s133
    %s134 = sphi 0, %s131
    %s135 = sphi 0, %s134
    %s151 = sphi 0, %s135
  $region4: #{basic_block_forward.1} parent=0 // loop_header_branch
    %14 = sbr.rel (%p12) target = $region8
  $region5: #{basic_block_forward.1} parent=0 // loop_body
    %s16 = ssub.s32 %s11, 1
    %s17 = ssub.s32 %s11, 2
    %s18 = sadd.s32 %s11, 1
    %s19 = ssub.s32 %s11, %s18
    %p20 = scmp.eq.s32.totalorder %s19, 0
    %s22 = sadd.s32 %s21, 1
    %s23 = scalar_select %p20, %s21, %s22
    %p26 = pneg %p20
    %p27 = scmp.eq.s32.totalorder %s11, 1
    %p28 = por %p26, %p27
    %p29 = scmp.ne.s32.totalorder %s21, %s24
    %p30 = scmp.eq.s32.totalorder %s11, 0
    %p31 = por %p29, %p30
    %p32 = scmp.ne.s32.totalorder %s21, %s24
    %p33 = scmp.eq.s32.totalorder %s16, 1
    %p34 = por %p32, %p33
    %p35 = scmp.ne.s32.totalorder %s24, %s25
    %p36 = scmp.eq.s32.totalorder %s16, 0
    %p37 = por %p35, %p36
    %p38 = scmp.ne.s32.totalorder %s24, %s25
    %p39 = scmp.eq.s32.totalorder %s17, 1
    %p40 = por %p38, %p39
    %p42 = scmp.ne.s32.totalorder %s25, %s41
    %p43 = scmp.eq.s32.totalorder %s17, 0
    %p44 = por %p42, %p43
    %s46 = sadd.s32 %s45, 1
    %p49 = scmp.eq.s32.totalorder %s11, 1
    %p50 = scmp.ne.s32.totalorder %s45, %s47
    %p51 = scmp.eq.s32.totalorder %s11, 0
    %p52 = por %p50, %p51
    %p53 = scmp.ne.s32.totalorder %s45, %s47
    %p54 = scmp.eq.s32.totalorder %s16, 1
    %p55 = por %p53, %p54
    %p56 = scmp.ne.s32.totalorder %s47, %s48
    %p57 = scmp.eq.s32.totalorder %s16, 0
    %p58 = por %p56, %p57
    %p59 = scmp.ne.s32.totalorder %s47, %s48
    %p60 = scmp.eq.s32.totalorder %s17, 1
    %p61 = por %p59, %p60
    %p63 = scmp.ne.s32.totalorder %s48, %s62
    %p64 = scmp.eq.s32.totalorder %s17, 0
    %p65 = por %p63, %p64
    %s67 = sadd.s32 %s66, 1
    %p70 = scmp.eq.s32.totalorder %s11, 1
    %p71 = scmp.ne.s32.totalorder %s66, %s68
    %p72 = scmp.eq.s32.totalorder %s11, 0
    %p73 = por %p71, %p72
    %p74 = scmp.ne.s32.totalorder %s66, %s68
    %p75 = scmp.eq.s32.totalorder %s16, 1
    %p76 = por %p74, %p75
    %p77 = scmp.ne.s32.totalorder %s68, %s69
    %p78 = scmp.eq.s32.totalorder %s16, 0
    %p79 = por %p77, %p78
    %p80 = scmp.ne.s32.totalorder %s68, %s69
    %p81 = scmp.eq.s32.totalorder %s17, 1
    %p82 = por %p80, %p81
    %p84 = scmp.ne.s32.totalorder %s69, %s83
    %p85 = scmp.eq.s32.totalorder %s17, 0
    %p86 = por %p84, %p85
    %s88 = sadd.s32 %s87, 1
    %p91 = scmp.eq.s32.totalorder %s11, 1
    %p92 = scmp.ne.s32.totalorder %s87, %s89
    %p93 = scmp.eq.s32.totalorder %s11, 0
    %p94 = por %p92, %p93
    %p95 = scmp.ne.s32.totalorder %s87, %s89
    %p96 = scmp.eq.s32.totalorder %s16, 1
    %p97 = por %p95, %p96
    %p98 = scmp.ne.s32.totalorder %s89, %s90
    %p99 = scmp.eq.s32.totalorder %s16, 0
    %p100 = por %p98, %p99
    %p101 = scmp.ne.s32.totalorder %s89, %s90
    %p102 = scmp.eq.s32.totalorder %s17, 1
    %p103 = por %p101, %p102
    %p105 = scmp.ne.s32.totalorder %s90, %s104
    %p106 = scmp.eq.s32.totalorder %s17, 0
    %p107 = por %p105, %p106
    %s109 = sadd.s32 %s108, 1
    %p112 = scmp.eq.s32.totalorder %s11, 1
    %p113 = scmp.ne.s32.totalorder %s108, %s110
    %p114 = scmp.eq.s32.totalorder %s11, 0
    %p115 = por %p113, %p114
    %p116 = scmp.ne.s32.totalorder %s108, %s110
    %p117 = scmp.eq.s32.totalorder %s16, 1
    %p118 = por %p116, %p117
    %p119 = scmp.ne.s32.totalorder %s110, %s111
    %p120 = scmp.eq.s32.totalorder %s16, 0
    %p121 = por %p119, %p120
    %p122 = scmp.ne.s32.totalorder %s110, %s111
    %p123 = scmp.eq.s32.totalorder %s17, 1
    %p124 = por %p122, %p123
    %p126 = scmp.ne.s32.totalorder %s111, %s125
    %p127 = scmp.eq.s32.totalorder %s17, 0
    %p128 = por %p126, %p127
    %s129 = ssub.s32 %s11, %s18
    %p130 = scmp.eq.s32.totalorder %s129, 0
    %s132 = sadd.s32 %s131, 1
    %s133 = scalar_select %p130, %s131, %s132
    %p136 = pneg %p130
    %p137 = scmp.eq.s32.totalorder %s11, 1
    %p138 = por %p136, %p137
    %p139 = scmp.ne.s32.totalorder %s131, %s134
    %p140 = scmp.eq.s32.totalorder %s11, 0
    %p141 = por %p139, %p140
    %p142 = scmp.ne.s32.totalorder %s131, %s134
    %p143 = scmp.eq.s32.totalorder %s16, 1
    %p144 = por %p142, %p143
    %p145 = scmp.ne.s32.totalorder %s134, %s135
    %p146 = scmp.eq.s32.totalorder %s16, 0
    %p147 = por %p145, %p146
    %p148 = scmp.ne.s32.totalorder %s134, %s135
    %p149 = scmp.eq.s32.totalorder %s17, 1
    %p150 = por %p148, %p149
    %p152 = scmp.ne.s32.totalorder %s135, %s151
    %p153 = scmp.eq.s32.totalorder %s17, 0
    %p154 = por %p152, %p153
    %p155 = scmp.le.s32.totalorder 1, %s11
    %p156 = scmp.lt.s32.totalorder %s11, 3
    %p157 = pnand %p155, %p156
    %p158 = pneg %p157
    // Predicated region
    $region9: #{basic_block_forward.1} parent=5 // pred_check
      _
    $region10: #{basic_block_forward.1} parent=5 // pred_check_branch
      %160 = sbr.rel (%p157) target = $region12
    $region11: #{basic_block_forward.1} parent=5 // pred_region
      %s161 = ssub.s32 %s11, 1
      // Predicated region
      $region13: #{basic_block_forward.1} parent=11 // pred_check
        %p162 = pneg %p58
      $region14: #{basic_block_forward.1} parent=11 // pred_check_branch
        %164 = sbr.rel (%p162) target = $region16
      $region15: #{basic_block_forward.1} parent=11 // pred_region
        _
      $region16: #{basic_block_forward.1} parent=11 // pred_fallthru
        _
      // Predicated region
      $region17: #{basic_block_forward.1} parent=11 // pred_check
        %p165 = pneg %p79
      $region18: #{basic_block_forward.1} parent=11 // pred_check_branch
        %167 = sbr.rel (%p165) target = $region20
      $region19: #{basic_block_forward.1} parent=11 // pred_region
        _
      $region20: #{basic_block_forward.1} parent=11 // pred_fallthru
        _
      // Predicated region
      $region21: #{basic_block_forward.1} parent=11 // pred_check
        %p168 = pneg %p100
      $region22: #{basic_block_forward.1} parent=11 // pred_check_branch
        %170 = sbr.rel (%p168) target = $region24
      $region23: #{basic_block_forward.1} parent=11 // pred_region
        _
      $region24: #{basic_block_forward.1} parent=11 // pred_fallthru
        _
      // Predicated region
      $region25: #{basic_block_forward.1} parent=11 // pred_check
        %p171 = pneg %p121
      $region26: #{basic_block_forward.1} parent=11 // pred_check_branch
        %173 = sbr.rel (%p171) target = $region28
      $region27: #{basic_block_forward.1} parent=11 // pred_region
        _
      $region28: #{basic_block_forward.1} parent=11 // pred_fallthru
        _
    $region12: #{basic_block_forward.1} parent=5 // pred_fallthru
      _
    %p174 = scmp.lt.s32.totalorder %s11, 2
    // Predicated region
    $region29: #{basic_block_forward.1} parent=5 // pred_check
      %p175 = pneg %p174
    $region30: #{basic_block_forward.1} parent=5 // pred_check_branch
      %177 = sbr.rel (%p175) target = $region32
    $region31: #{basic_block_forward.1} parent=5 // pred_region
      // Predicated region
      $region33: #{basic_block_forward.1} parent=31 // pred_check
        %p178 = pneg %p31
      $region34: #{basic_block_forward.1} parent=31 // pred_check_branch
        %180 = sbr.rel (%p178) target = $region36
      $region35: #{basic_block_forward.1} parent=31 // pred_region
        %s181 = smul.u32 16, %s11
        %p182 = scmp.lt.s32.totalorder %s181, 31
        %s183 = scalar_select %p182, %s181, 31
        %s184 = smul.addr %s183, 2
        %s185 = smul.addr %s184, 8
        %s186 = scalar_lea.vmem %s0, %s185
        %s187 = smul.u32 16, %s11
      $region36: #{basic_block_forward.1} parent=31 // pred_fallthru
        _
    $region32: #{basic_block_forward.1} parent=5 // pred_fallthru
      _
    %p188 = scmp.le.s32.totalorder 1, %s11
    %p189 = scmp.lt.s32.totalorder %s11, 3
    %p190 = pnand %p188, %p189
    %p191 = pneg %p190
    // Predicated region
    $region37: #{basic_block_forward.1} parent=5 // pred_check
      _
    $region38: #{basic_block_forward.1} parent=5 // pred_check_branch
      %193 = sbr.rel (%p190) target = $region40
    $region39: #{basic_block_forward.1} parent=5 // pred_region
      %s194 = ssub.s32 %s11, 1
      %s195 = smul.u32 16, %s16
      %p196 = scmp.lt.s32.totalorder %s195, 31
      %s197 = scalar_select %p196, %s195, 31
      %s198 = smul.addr %s197, 2
      %s199 = smul.addr %s198, 8
      %s200 = scalar_lea.vmem %s0, %s199
      %p201 = pneg %p37
      %p202 = pneg %p34
      %p203 = pneg %p58
      %p204 = pneg %p55
      %p205 = pneg %p79
      %p206 = pneg %p76
      %p207 = pneg %p100
      %p208 = pneg %p97
      %p209 = pneg %p121
      %p210 = pneg %p118
      %p211 = pneg %p147
      %p212 = pneg %p144
      %s213 = smul.u32 16, %s16
      %p214 = scmp.lt.s32.totalorder %s213, 31
      %s215 = scalar_select %p214, %s213, 31
      %s216 = smul.addr %s215, 2
      %s217 = smul.addr %s216, 8
      %s218 = scalar_lea.vmem %s5, %s217
      %s219 = smul.u32 16, %s16
      %p220 = scmp.lt.s32.totalorder %s219, 31
      %s221 = scalar_select %p220, %s219, 31
      %s222 = smul.addr %s221, 2
      %s223 = smul.addr %s222, 8
      %s224 = scalar_lea.vmem %s0, %s223
      %s225 = smul.u32 16, %s16
      %s226 = smul.u32 16, %s16
      %p227 = scmp.lt.s32.totalorder %s226, 31
      %s228 = scalar_select %p227, %s226, 31
      %s229 = smul.addr %s228, 2
      %s230 = smul.addr %s229, 8
      %s231 = scalar_lea.vmem %s5, %s230
      %s232 = smul.u32 16, %s16
      %v234 = vlaneseq
      %v235 = vshrl.u32 %v234, 7
      %v236 = vadd.s32 %v235, 8
      %vm237 = vcmp.ne.s32.totalorder %v235, 0
      %vm238 = vcmp.ne.s32.totalorder %v236, 0
      %vm239 = vcmp.ne.s32.totalorder %v235, 15
      %vm240 = vcmp.ne.s32.totalorder %v236, 15
      %v241 = vld [vmem:[%s224] sm:$0xff]
      %v242 = vld [vmem:[%s224 + $0x8] sm:$0xff]
      %v243 = vld [vmem:[%s224 + $0x10] sm:$0xff]
      %v244 = vld [vmem:[%s224 + $0x18] sm:$0xff]
      %v245 = vld [vmem:[%s224 + $0x20] sm:$0xff]
      %v246 = vld [vmem:[%s224 + $0x28] sm:$0xff]
      %v247 = vld [vmem:[%s224 + $0x30] sm:$0xff]
      %v248 = vld [vmem:[%s224 + $0x38] sm:$0xff]
      %v249 = vld [vmem:[%s224 + $0x40] sm:$0xff]
      %v250 = vld [vmem:[%s224 + $0x48] sm:$0xff]
      %v251 = vld [vmem:[%s224 + $0x50] sm:$0xff]
      %v252 = vld [vmem:[%s224 + $0x58] sm:$0xff]
      %v253 = vld [vmem:[%s224 + $0x60] sm:$0xff]
      %v254 = vld [vmem:[%s224 + $0x68] sm:$0xff]
      %v255 = vld [vmem:[%s224 + $0x70] sm:$0xff]
      %v256 = vld [vmem:[%s224 + $0x78] sm:$0xff]
      %v257 = vld [vmem:[%s224 + $0x80] sm:$0xff]
      %v258 = vld [vmem:[%s224 + $0x88] sm:$0xff]
      %v259 = vld [vmem:[%s224 + $0x90] sm:$0xff]
      %v260 = vld [vmem:[%s224 + $0x98] sm:$0xff]
      %v261 = vld [vmem:[%s224 + $0xa0] sm:$0xff]
      %v262 = vld [vmem:[%s224 + $0xa8] sm:$0xff]
      %v263 = vld [vmem:[%s224 + $0xb0] sm:$0xff]
      %v264 = vld [vmem:[%s224 + $0xb8] sm:$0xff]
      %v265 = vld [vmem:[%s224 + $0xc0] sm:$0xff]
      %v266 = vld [vmem:[%s224 + $0xc8] sm:$0xff]
      %v267 = vld [vmem:[%s224 + $0xd0] sm:$0xff]
      %v268 = vld [vmem:[%s224 + $0xd8] sm:$0xff]
      %v269 = vld [vmem:[%s224 + $0xe0] sm:$0xff]
      %v270 = vld [vmem:[%s224 + $0xe8] sm:$0xff]
      %v271 = vld [vmem:[%s224 + $0xf0] sm:$0xff]
      %v272 = vld [vmem:[%s224 + $0xf8] sm:$0xff]
      %v273 = vpack.c.bf16 %v242, %v241
      %v274 = vpack.c.bf16 %v244, %v243
      %v275 = vpack.c.bf16 %v246, %v245
      %v276 = vpack.c.bf16 %v248, %v247
      %v277 = vpack.c.bf16 %v250, %v249
      %v278 = vpack.c.bf16 %v252, %v251
      %v279 = vpack.c.bf16 %v254, %v253
      %v280 = vpack.c.bf16 %v256, %v255
      %v281 = vpack.c.bf16 %v258, %v257
      %v282 = vpack.c.bf16 %v260, %v259
      %v283 = vpack.c.bf16 %v262, %v261
      %v284 = vpack.c.bf16 %v264, %v263
      %v285 = vpack.c.bf16 %v266, %v265
      %v286 = vpack.c.bf16 %v268, %v267
      %v287 = vpack.c.bf16 %v270, %v269
      %v288 = vpack.c.bf16 %v272, %v271
      %v289 = vld [vmem:[%s1] sm:$0xf]
      %v290 = vld [vmem:[%s1 + $0x4] sm:$0xf]
      %v291 = vld [vmem:[%s1 + $0x8] sm:$0xf]
      %v292 = vld [vmem:[%s1 + $0xc] sm:$0xf]
      %v293 = vld [vmem:[%s1 + $0x10] sm:$0xf]
      %v294 = vld [vmem:[%s1 + $0x14] sm:$0xf]
      %v295 = vld [vmem:[%s1 + $0x18] sm:$0xf]
      %v296 = vld [vmem:[%s1 + $0x1c] sm:$0xf]
      %v297 = vld [vmem:[%s1 + $0x20] sm:$0xf]
      %v298 = vld [vmem:[%s1 + $0x24] sm:$0xf]
      %v299 = vld [vmem:[%s1 + $0x28] sm:$0xf]
      %v300 = vld [vmem:[%s1 + $0x2c] sm:$0xf]
      %v301 = vld [vmem:[%s1 + $0x30] sm:$0xf]
      %v302 = vld [vmem:[%s1 + $0x34] sm:$0xf]
      %v303 = vld [vmem:[%s1 + $0x38] sm:$0xf]
      %v304 = vld [vmem:[%s1 + $0x3c] sm:$0xf]
      %v321 = vunpack.c.l.b16 %v289
      %v322 = vunpack.c.l.b16 %v290
      %v323 = vunpack.c.l.b16 %v291
      %v324 = vunpack.c.l.b16 %v292
      %v325 = vunpack.c.l.b16 %v293
      %v326 = vunpack.c.l.b16 %v294
      %v327 = vunpack.c.l.b16 %v295
      %v328 = vunpack.c.l.b16 %v296
      %v329 = vunpack.c.l.b16 %v297
      %v330 = vunpack.c.l.b16 %v298
      %v331 = vunpack.c.l.b16 %v299
      %v332 = vunpack.c.l.b16 %v300
      %v333 = vunpack.c.l.b16 %v301
      %v334 = vunpack.c.l.b16 %v302
      %v335 = vunpack.c.l.b16 %v303
      %v336 = vunpack.c.l.b16 %v304
      %v337 = vpack.c.b16 %v322, %v321
      %v338 = vpack.c.b16 %v324, %v323
      %v339 = vpack.c.b16 %v326, %v325
      %v340 = vpack.c.b16 %v328, %v327
      %v341 = vpack.c.b16 %v330, %v329
      %v342 = vpack.c.b16 %v332, %v331
      %v343 = vpack.c.b16 %v334, %v333
      %v344 = vpack.c.b16 %v336, %v335
      %353 = vmatprep.subr.bf16.mxu0 0
      %354 = vmatpush1.bf16.msra.mxu0 %v344
      %355 = vmatprep.subr.bf16.mxu0 0
      %356 = vmatpush1.bf16.msra.mxu0 %v343
      %357 = vmatprep.subr.bf16.mxu0 0
      %358 = vmatpush1.bf16.msra.mxu0 %v342
      %359 = vmatprep.subr.bf16.mxu0 0
      %360 = vmatpush1.bf16.msra.mxu0 %v341
      %361 = vmatprep.subr.bf16.mxu0 0
      %362 = vmatpush1.bf16.msra.mxu0 %v340
      %363 = vmatprep.subr.bf16.mxu0 0
      %364 = vmatpush1.bf16.msra.mxu0 %v339
      %365 = vmatprep.subr.bf16.mxu0 0
      %366 = vmatpush1.bf16.msra.mxu0 %v338
      %367 = vmatprep.subr.bf16.mxu0 0
      %368 = vmatpush1.bf16.msra.mxu0 %v337
      %369 = vmatprep.subr.bf16.mxu0 0
      %370 = vmatpush2.bf16.msra.mxu0 0
      %371 = vmatprep.subr.bf16.mxu0 0
      %372 = vmatpush2.bf16.msra.mxu0 0
      %373 = vmatprep.subr.bf16.mxu0 0
      %374 = vmatpush2.bf16.msra.mxu0 0
      %375 = vmatprep.subr.bf16.mxu0 0
      %376 = vmatpush2.bf16.msra.mxu0 0
      %377 = vmatprep.subr.bf16.mxu0 0
      %378 = vmatpush2.bf16.msra.mxu0 0
      %379 = vmatprep.subr.bf16.mxu0 0
      %380 = vmatpush2.bf16.msra.mxu0 0
      %381 = vmatprep.subr.bf16.mxu0 0
      %382 = vmatpush2.bf16.msra.mxu0 0
      %383 = vmatprep.subr.bf16.mxu0 0
      %384 = vmatpush2.bf16.msra.mxu0 0
      %385 = vmatprep.mubr.bf16.mxu0 0
      %386 = vmatmul.mubr.bf16.gmra.mxu0 %v273
      %v387 = vpop.f32.mrf.mxu0
      %v388 = vadd.f32 0.0, %v387
      %v389 = vpop.f32.mrf.mxu0
      %v390 = vpop.f32.mrf.mxu0
      %v391 = vadd.f32 0.0, %v390
      %v392 = vpop.f32.mrf.mxu0
      %393 = vmatprep.mubr.bf16.mxu0 0
      %394 = vmatmul.mubr.bf16.gmra.mxu0 %v274
      %v395 = vpop.f32.mrf.mxu0
      %v396 = vadd.f32 0.0, %v395
      %v397 = vpop.f32.mrf.mxu0
      %v398 = vpop.f32.mrf.mxu0
      %v399 = vadd.f32 0.0, %v398
      %v400 = vpop.f32.mrf.mxu0
      %401 = vmatprep.mubr.bf16.mxu0 0
      %402 = vmatmul.mubr.bf16.gmra.mxu0 %v275
      %v403 = vpop.f32.mrf.mxu0
      %v404 = vadd.f32 0.0, %v403
      %v405 = vpop.f32.mrf.mxu0
      %v406 = vpop.f32.mrf.mxu0
      %v407 = vadd.f32 0.0, %v406
      %v408 = vpop.f32.mrf.mxu0
      %409 = vmatprep.mubr.bf16.mxu0 0
      %410 = vmatmul.mubr.bf16.gmra.mxu0 %v276
      %v411 = vpop.f32.mrf.mxu0
      %v412 = vadd.f32 0.0, %v411
      %v413 = vpop.f32.mrf.mxu0
      %v414 = vpop.f32.mrf.mxu0
      %v415 = vadd.f32 0.0, %v414
      %v416 = vpop.f32.mrf.mxu0
      %417 = vmatprep.mubr.bf16.mxu0 0
      %418 = vmatmul.mubr.bf16.gmra.mxu0 %v277
      %v419 = vpop.f32.mrf.mxu0
      %v420 = vadd.f32 0.0, %v419
      %v421 = vpop.f32.mrf.mxu0
      %v422 = vpop.f32.mrf.mxu0
      %v423 = vadd.f32 0.0, %v422
      %v424 = vpop.f32.mrf.mxu0
      %425 = vmatprep.mubr.bf16.mxu0 0
      %426 = vmatmul.mubr.bf16.gmra.mxu0 %v278
      %v427 = vpop.f32.mrf.mxu0
      %v428 = vadd.f32 0.0, %v427
      %v429 = vpop.f32.mrf.mxu0
      %v430 = vpop.f32.mrf.mxu0
      %v431 = vadd.f32 0.0, %v430
      %v432 = vpop.f32.mrf.mxu0
      %433 = vmatprep.mubr.bf16.mxu0 0
      %434 = vmatmul.mubr.bf16.gmra.mxu0 %v279
      %v435 = vpop.f32.mrf.mxu0
      %v436 = vadd.f32 0.0, %v435
      %v437 = vpop.f32.mrf.mxu0
      %v438 = vpop.f32.mrf.mxu0
      %v439 = vadd.f32 0.0, %v438
      %v440 = vpop.f32.mrf.mxu0
      %441 = vmatprep.mubr.bf16.mxu0 0
      %442 = vmatmul.mubr.bf16.gmra.mxu0 %v280
      %v443 = vpop.f32.mrf.mxu0
      %v444 = vadd.f32 0.0, %v443
      %v445 = vpop.f32.mrf.mxu0
      %v446 = vpop.f32.mrf.mxu0
      %v447 = vadd.f32 0.0, %v446
      %v448 = vpop.f32.mrf.mxu0
      %449 = vmatprep.mubr.bf16.mxu0 0
      %450 = vmatmul.mubr.bf16.gmra.mxu0 %v281
      %v451 = vpop.f32.mrf.mxu0
      %v452 = vadd.f32 0.0, %v451
      %v453 = vpop.f32.mrf.mxu0
      %v454 = vpop.f32.mrf.mxu0
      %v455 = vadd.f32 0.0, %v454
      %v456 = vpop.f32.mrf.mxu0
      %457 = vmatprep.mubr.bf16.mxu0 0
      %458 = vmatmul.mubr.bf16.gmra.mxu0 %v282
      %v459 = vpop.f32.mrf.mxu0
      %v460 = vadd.f32 0.0, %v459
      %v461 = vpop.f32.mrf.mxu0
      %v462 = vpop.f32.mrf.mxu0
      %v463 = vadd.f32 0.0, %v462
      %v464 = vpop.f32.mrf.mxu0
      %465 = vmatprep.mubr.bf16.mxu0 0
      %466 = vmatmul.mubr.bf16.gmra.mxu0 %v283
      %v467 = vpop.f32.mrf.mxu0
      %v468 = vadd.f32 0.0, %v467
      %v469 = vpop.f32.mrf.mxu0
      %v470 = vpop.f32.mrf.mxu0
      %v471 = vadd.f32 0.0, %v470
      %v472 = vpop.f32.mrf.mxu0
      %473 = vmatprep.mubr.bf16.mxu0 0
      %474 = vmatmul.mubr.bf16.gmra.mxu0 %v284
      %v475 = vpop.f32.mrf.mxu0
      %v476 = vadd.f32 0.0, %v475
      %v477 = vpop.f32.mrf.mxu0
      %v478 = vpop.f32.mrf.mxu0
      %v479 = vadd.f32 0.0, %v478
      %v480 = vpop.f32.mrf.mxu0
      %481 = vmatprep.mubr.bf16.mxu0 0
      %482 = vmatmul.mubr.bf16.gmra.mxu0 %v285
      %v483 = vpop.f32.mrf.mxu0
      %v484 = vadd.f32 0.0, %v483
      %v485 = vpop.f32.mrf.mxu0
      %v486 = vpop.f32.mrf.mxu0
      %v487 = vadd.f32 0.0, %v486
      %v488 = vpop.f32.mrf.mxu0
      %489 = vmatprep.mubr.bf16.mxu0 0
      %490 = vmatmul.mubr.bf16.gmra.mxu0 %v286
      %v491 = vpop.f32.mrf.mxu0
      %v492 = vadd.f32 0.0, %v491
      %v493 = vpop.f32.mrf.mxu0
      %v494 = vpop.f32.mrf.mxu0
      %v495 = vadd.f32 0.0, %v494
      %v496 = vpop.f32.mrf.mxu0
      %497 = vmatprep.mubr.bf16.mxu0 0
      %498 = vmatmul.mubr.bf16.gmra.mxu0 %v287
      %v499 = vpop.f32.mrf.mxu0
      %v500 = vadd.f32 0.0, %v499
      %v501 = vpop.f32.mrf.mxu0
      %v502 = vpop.f32.mrf.mxu0
      %v503 = vadd.f32 0.0, %v502
      %v504 = vpop.f32.mrf.mxu0
      %505 = vmatprep.mubr.bf16.mxu0 0
      %506 = vmatmul.mubr.bf16.gmra.mxu0 %v288
      %v507 = vpop.f32.mrf.mxu0
      %v508 = vadd.f32 0.0, %v507
      %v509 = vpop.f32.mrf.mxu0
      %v510 = vpop.f32.mrf.mxu0
      %v511 = vadd.f32 0.0, %v510
      %v512 = vpop.f32.mrf.mxu0
      %513 = vdwg.mxu0
      %v514 = vld [vmem:[%s1 + $0x40] sm:$0xf]
      %v515 = vld [vmem:[%s1 + $0x44] sm:$0xf]
      %v516 = vld [vmem:[%s1 + $0x48] sm:$0xf]
      %v517 = vld [vmem:[%s1 + $0x4c] sm:$0xf]
      %v518 = vld [vmem:[%s1 + $0x50] sm:$0xf]
      %v519 = vld [vmem:[%s1 + $0x54] sm:$0xf]
      %v520 = vld [vmem:[%s1 + $0x58] sm:$0xf]
      %v521 = vld [vmem:[%s1 + $0x5c] sm:$0xf]
      %v522 = vld [vmem:[%s1 + $0x60] sm:$0xf]
      %v523 = vld [vmem:[%s1 + $0x64] sm:$0xf]
      %v524 = vld [vmem:[%s1 + $0x68] sm:$0xf]
      %v525 = vld [vmem:[%s1 + $0x6c] sm:$0xf]
      %v526 = vld [vmem:[%s1 + $0x70] sm:$0xf]
      %v527 = vld [vmem:[%s1 + $0x74] sm:$0xf]
      %v528 = vld [vmem:[%s1 + $0x78] sm:$0xf]
      %v529 = vld [vmem:[%s1 + $0x7c] sm:$0xf]
      %v546 = vunpack.c.l.b16 %v514
      %v547 = vunpack.c.l.b16 %v515
      %v548 = vunpack.c.l.b16 %v516
      %v549 = vunpack.c.l.b16 %v517
      %v550 = vunpack.c.l.b16 %v518
      %v551 = vunpack.c.l.b16 %v519
      %v552 = vunpack.c.l.b16 %v520
      %v553 = vunpack.c.l.b16 %v521
      %v554 = vunpack.c.l.b16 %v522
      %v555 = vunpack.c.l.b16 %v523
      %v556 = vunpack.c.l.b16 %v524
      %v557 = vunpack.c.l.b16 %v525
      %v558 = vunpack.c.l.b16 %v526
      %v559 = vunpack.c.l.b16 %v527
      %v560 = vunpack.c.l.b16 %v528
      %v561 = vunpack.c.l.b16 %v529
      %v562 = vpack.c.b16 %v547, %v546
      %v563 = vpack.c.b16 %v549, %v548
      %v564 = vpack.c.b16 %v551, %v550
      %v565 = vpack.c.b16 %v553, %v552
      %v566 = vpack.c.b16 %v555, %v554
      %v567 = vpack.c.b16 %v557, %v556
      %v568 = vpack.c.b16 %v559, %v558
      %v569 = vpack.c.b16 %v561, %v560
      %578 = vmatprep.subr.bf16.mxu0 0
      %579 = vmatpush1.bf16.msra.mxu0 %v569
      %580 = vmatprep.subr.bf16.mxu0 0
      %581 = vmatpush1.bf16.msra.mxu0 %v568
      %582 = vmatprep.subr.bf16.mxu0 0
      %583 = vmatpush1.bf16.msra.mxu0 %v567
      %584 = vmatprep.subr.bf16.mxu0 0
      %585 = vmatpush1.bf16.msra.mxu0 %v566
      %586 = vmatprep.subr.bf16.mxu0 0
      %587 = vmatpush1.bf16.msra.mxu0 %v565
      %588 = vmatprep.subr.bf16.mxu0 0
      %589 = vmatpush1.bf16.msra.mxu0 %v564
      %590 = vmatprep.subr.bf16.mxu0 0
      %591 = vmatpush1.bf16.msra.mxu0 %v563
      %592 = vmatprep.subr.bf16.mxu0 0
      %593 = vmatpush1.bf16.msra.mxu0 %v562
      %594 = vmatprep.subr.bf16.mxu0 0
      %595 = vmatpush2.bf16.msra.mxu0 0
      %596 = vmatprep.subr.bf16.mxu0 0
      %597 = vmatpush2.bf16.msra.mxu0 0
      %598 = vmatprep.subr.bf16.mxu0 0
      %599 = vmatpush2.bf16.msra.mxu0 0
      %600 = vmatprep.subr.bf16.mxu0 0
      %601 = vmatpush2.bf16.msra.mxu0 0
      %602 = vmatprep.subr.bf16.mxu0 0
      %603 = vmatpush2.bf16.msra.mxu0 0
      %604 = vmatprep.subr.bf16.mxu0 0
      %605 = vmatpush2.bf16.msra.mxu0 0
      %606 = vmatprep.subr.bf16.mxu0 0
      %607 = vmatpush2.bf16.msra.mxu0 0
      %608 = vmatprep.subr.bf16.mxu0 0
      %609 = vmatpush2.bf16.msra.mxu0 0
      %610 = vmatprep.mubr.bf16.mxu0 0
      %611 = vmatmul.mubr.bf16.gmra.mxu0 %v273
      %v612 = vpop.f32.mrf.mxu0
      %v613 = vadd.f32 0.0, %v612
      %v614 = vpop.f32.mrf.mxu0
      %v615 = vpop.f32.mrf.mxu0
      %v616 = vadd.f32 0.0, %v615
      %v617 = vpop.f32.mrf.mxu0
      %618 = vmatprep.mubr.bf16.mxu0 0
      %619 = vmatmul.mubr.bf16.gmra.mxu0 %v274
      %v620 = vpop.f32.mrf.mxu0
      %v621 = vadd.f32 0.0, %v620
      %v622 = vpop.f32.mrf.mxu0
      %v623 = vpop.f32.mrf.mxu0
      %v624 = vadd.f32 0.0, %v623
      %v625 = vpop.f32.mrf.mxu0
      %626 = vmatprep.mubr.bf16.mxu0 0
      %627 = vmatmul.mubr.bf16.gmra.mxu0 %v275
      %v628 = vpop.f32.mrf.mxu0
      %v629 = vadd.f32 0.0, %v628
      %v630 = vpop.f32.mrf.mxu0
      %v631 = vpop.f32.mrf.mxu0
      %v632 = vadd.f32 0.0, %v631
      %v633 = vpop.f32.mrf.mxu0
      %634 = vmatprep.mubr.bf16.mxu0 0
      %635 = vmatmul.mubr.bf16.gmra.mxu0 %v276
      %v636 = vpop.f32.mrf.mxu0
      %v637 = vadd.f32 0.0, %v636
      %v638 = vpop.f32.mrf.mxu0
      %v639 = vpop.f32.mrf.mxu0
      %v640 = vadd.f32 0.0, %v639
      %v641 = vpop.f32.mrf.mxu0
      %642 = vmatprep.mubr.bf16.mxu0 0
      %643 = vmatmul.mubr.bf16.gmra.mxu0 %v277
      %v644 = vpop.f32.mrf.mxu0
      %v645 = vadd.f32 0.0, %v644
      %v646 = vpop.f32.mrf.mxu0
      %v647 = vpop.f32.mrf.mxu0
      %v648 = vadd.f32 0.0, %v647
      %v649 = vpop.f32.mrf.mxu0
      %650 = vmatprep.mubr.bf16.mxu0 0
      %651 = vmatmul.mubr.bf16.gmra.mxu0 %v278
      %v652 = vpop.f32.mrf.mxu0
      %v653 = vadd.f32 0.0, %v652
      %v654 = vpop.f32.mrf.mxu0
      %v655 = vpop.f32.mrf.mxu0
      %v656 = vadd.f32 0.0, %v655
      %v657 = vpop.f32.mrf.mxu0
      %658 = vmatprep.mubr.bf16.mxu0 0
      %659 = vmatmul.mubr.bf16.gmra.mxu0 %v279
      %v660 = vpop.f32.mrf.mxu0
      %v661 = vadd.f32 0.0, %v660
      %v662 = vpop.f32.mrf.mxu0
      %v663 = vpop.f32.mrf.mxu0
      %v664 = vadd.f32 0.0, %v663
      %v665 = vpop.f32.mrf.mxu0
      %666 = vmatprep.mubr.bf16.mxu0 0
      %667 = vmatmul.mubr.bf16.gmra.mxu0 %v280
      %v668 = vpop.f32.mrf.mxu0
      %v669 = vadd.f32 0.0, %v668
      %v670 = vpop.f32.mrf.mxu0
      %v671 = vpop.f32.mrf.mxu0
      %v672 = vadd.f32 0.0, %v671
      %v673 = vpop.f32.mrf.mxu0
      %674 = vmatprep.mubr.bf16.mxu0 0
      %675 = vmatmul.mubr.bf16.gmra.mxu0 %v281
      %v676 = vpop.f32.mrf.mxu0
      %v677 = vadd.f32 0.0, %v676
      %v678 = vpop.f32.mrf.mxu0
      %v679 = vpop.f32.mrf.mxu0
      %v680 = vadd.f32 0.0, %v679
      %v681 = vpop.f32.mrf.mxu0
      %682 = vmatprep.mubr.bf16.mxu0 0
      %683 = vmatmul.mubr.bf16.gmra.mxu0 %v282
      %v684 = vpop.f32.mrf.mxu0
      %v685 = vadd.f32 0.0, %v684
      %v686 = vpop.f32.mrf.mxu0
      %v687 = vpop.f32.mrf.mxu0
      %v688 = vadd.f32 0.0, %v687
      %v689 = vpop.f32.mrf.mxu0
      %690 = vmatprep.mubr.bf16.mxu0 0
      %691 = vmatmul.mubr.bf16.gmra.mxu0 %v283
      %v692 = vpop.f32.mrf.mxu0
      %v693 = vadd.f32 0.0, %v692
      %v694 = vpop.f32.mrf.mxu0
      %v695 = vpop.f32.mrf.mxu0
      %v696 = vadd.f32 0.0, %v695
      %v697 = vpop.f32.mrf.mxu0
      %698 = vmatprep.mubr.bf16.mxu0 0
      %699 = vmatmul.mubr.bf16.gmra.mxu0 %v284
      %v700 = vpop.f32.mrf.mxu0
      %v701 = vadd.f32 0.0, %v700
      %v702 = vpop.f32.mrf.mxu0
      %v703 = vpop.f32.mrf.mxu0
      %v704 = vadd.f32 0.0, %v703
      %v705 = vpop.f32.mrf.mxu0
      %706 = vmatprep.mubr.bf16.mxu0 0
      %707 = vmatmul.mubr.bf16.gmra.mxu0 %v285
      %v708 = vpop.f32.mrf.mxu0
      %v709 = vadd.f32 0.0, %v708
      %v710 = vpop.f32.mrf.mxu0
      %v711 = vpop.f32.mrf.mxu0
      %v712 = vadd.f32 0.0, %v711
      %v713 = vpop.f32.mrf.mxu0
      %714 = vmatprep.mubr.bf16.mxu0 0
      %715 = vmatmul.mubr.bf16.gmra.mxu0 %v286
      %v716 = vpop.f32.mrf.mxu0
      %v717 = vadd.f32 0.0, %v716
      %v718 = vpop.f32.mrf.mxu0
      %v719 = vpop.f32.mrf.mxu0
      %v720 = vadd.f32 0.0, %v719
      %v721 = vpop.f32.mrf.mxu0
      %722 = vmatprep.mubr.bf16.mxu0 0
      %723 = vmatmul.mubr.bf16.gmra.mxu0 %v287
      %v724 = vpop.f32.mrf.mxu0
      %v725 = vadd.f32 0.0, %v724
      %v726 = vpop.f32.mrf.mxu0
      %v727 = vpop.f32.mrf.mxu0
      %v728 = vadd.f32 0.0, %v727
      %v729 = vpop.f32.mrf.mxu0
      %730 = vmatprep.mubr.bf16.mxu0 0
      %731 = vmatmul.mubr.bf16.gmra.mxu0 %v288
      %v732 = vpop.f32.mrf.mxu0
      %v733 = vadd.f32 0.0, %v732
      %v734 = vpop.f32.mrf.mxu0
      %v735 = vpop.f32.mrf.mxu0
      %v736 = vadd.f32 0.0, %v735
      %v737 = vpop.f32.mrf.mxu0
      %738 = vdwg.mxu0
      %v739 = vld [vmem:[%s1 + $0x80] sm:$0xf]
      %v740 = vld [vmem:[%s1 + $0x84] sm:$0xf]
      %v741 = vld [vmem:[%s1 + $0x88] sm:$0xf]
      %v742 = vld [vmem:[%s1 + $0x8c] sm:$0xf]
      %v743 = vld [vmem:[%s1 + $0x90] sm:$0xf]
      %v744 = vld [vmem:[%s1 + $0x94] sm:$0xf]
      %v745 = vld [vmem:[%s1 + $0x98] sm:$0xf]
      %v746 = vld [vmem:[%s1 + $0x9c] sm:$0xf]
      %v747 = vld [vmem:[%s1 + $0xa0] sm:$0xf]
      %v748 = vld [vmem:[%s1 + $0xa4] sm:$0xf]
      %v749 = vld [vmem:[%s1 + $0xa8] sm:$0xf]
      %v750 = vld [vmem:[%s1 + $0xac] sm:$0xf]
      %v751 = vld [vmem:[%s1 + $0xb0] sm:$0xf]
      %v752 = vld [vmem:[%s1 + $0xb4] sm:$0xf]
      %v753 = vld [vmem:[%s1 + $0xb8] sm:$0xf]
      %v754 = vld [vmem:[%s1 + $0xbc] sm:$0xf]
      %v771 = vunpack.c.l.b16 %v739
      %v772 = vunpack.c.l.b16 %v740
      %v773 = vunpack.c.l.b16 %v741
      %v774 = vunpack.c.l.b16 %v742
      %v775 = vunpack.c.l.b16 %v743
      %v776 = vunpack.c.l.b16 %v744
      %v777 = vunpack.c.l.b16 %v745
      %v778 = vunpack.c.l.b16 %v746
      %v779 = vunpack.c.l.b16 %v747
      %v780 = vunpack.c.l.b16 %v748
      %v781 = vunpack.c.l.b16 %v749
      %v782 = vunpack.c.l.b16 %v750
      %v783 = vunpack.c.l.b16 %v751
      %v784 = vunpack.c.l.b16 %v752
      %v785 = vunpack.c.l.b16 %v753
      %v786 = vunpack.c.l.b16 %v754
      %v787 = vpack.c.b16 %v772, %v771
      %v788 = vpack.c.b16 %v774, %v773
      %v789 = vpack.c.b16 %v776, %v775
      %v790 = vpack.c.b16 %v778, %v777
      %v791 = vpack.c.b16 %v780, %v779
      %v792 = vpack.c.b16 %v782, %v781
      %v793 = vpack.c.b16 %v784, %v783
      %v794 = vpack.c.b16 %v786, %v785
      %803 = vmatprep.subr.bf16.mxu0 0
      %804 = vmatpush1.bf16.msra.mxu0 %v794
      %805 = vmatprep.subr.bf16.mxu0 0
      %806 = vmatpush1.bf16.msra.mxu0 %v793
      %807 = vmatprep.subr.bf16.mxu0 0
      %808 = vmatpush1.bf16.msra.mxu0 %v792
      %809 = vmatprep.subr.bf16.mxu0 0
      %810 = vmatpush1.bf16.msra.mxu0 %v791
      %811 = vmatprep.subr.bf16.mxu0 0
      %812 = vmatpush1.bf16.msra.mxu0 %v790
      %813 = vmatprep.subr.bf16.mxu0 0
      %814 = vmatpush1.bf16.msra.mxu0 %v789
      %815 = vmatprep.subr.bf16.mxu0 0
      %816 = vmatpush1.bf16.msra.mxu0 %v788
      %817 = vmatprep.subr.bf16.mxu0 0
      %818 = vmatpush1.bf16.msra.mxu0 %v787
      %819 = vmatprep.subr.bf16.mxu0 0
      %820 = vmatpush2.bf16.msra.mxu0 0
      %821 = vmatprep.subr.bf16.mxu0 0
      %822 = vmatpush2.bf16.msra.mxu0 0
      %823 = vmatprep.subr.bf16.mxu0 0
      %824 = vmatpush2.bf16.msra.mxu0 0
      %825 = vmatprep.subr.bf16.mxu0 0
      %826 = vmatpush2.bf16.msra.mxu0 0
      %827 = vmatprep.subr.bf16.mxu0 0
      %828 = vmatpush2.bf16.msra.mxu0 0
      %829 = vmatprep.subr.bf16.mxu0 0
      %830 = vmatpush2.bf16.msra.mxu0 0
      %831 = vmatprep.subr.bf16.mxu0 0
      %832 = vmatpush2.bf16.msra.mxu0 0
      %833 = vmatprep.subr.bf16.mxu0 0
      %834 = vmatpush2.bf16.msra.mxu0 0
      %835 = vmatprep.mubr.bf16.mxu0 0
      %836 = vmatmul.mubr.bf16.gmra.mxu0 %v273
      %v837 = vpop.f32.mrf.mxu0
      %v838 = vadd.f32 0.0, %v837
      %v839 = vpop.f32.mrf.mxu0
      %v840 = vpop.f32.mrf.mxu0
      %v841 = vadd.f32 0.0, %v840
      %v842 = vpop.f32.mrf.mxu0
      %843 = vmatprep.mubr.bf16.mxu0 0
      %844 = vmatmul.mubr.bf16.gmra.mxu0 %v274
      %v845 = vpop.f32.mrf.mxu0
      %v846 = vadd.f32 0.0, %v845
      %v847 = vpop.f32.mrf.mxu0
      %v848 = vpop.f32.mrf.mxu0
      %v849 = vadd.f32 0.0, %v848
      %v850 = vpop.f32.mrf.mxu0
      %851 = vmatprep.mubr.bf16.mxu0 0
      %852 = vmatmul.mubr.bf16.gmra.mxu0 %v275
      %v853 = vpop.f32.mrf.mxu0
      %v854 = vadd.f32 0.0, %v853
      %v855 = vpop.f32.mrf.mxu0
      %v856 = vpop.f32.mrf.mxu0
      %v857 = vadd.f32 0.0, %v856
      %v858 = vpop.f32.mrf.mxu0
      %859 = vmatprep.mubr.bf16.mxu0 0
      %860 = vmatmul.mubr.bf16.gmra.mxu0 %v276
      %v861 = vpop.f32.mrf.mxu0
      %v862 = vadd.f32 0.0, %v861
      %v863 = vpop.f32.mrf.mxu0
      %v864 = vpop.f32.mrf.mxu0
      %v865 = vadd.f32 0.0, %v864
      %v866 = vpop.f32.mrf.mxu0
      %867 = vmatprep.mubr.bf16.mxu0 0
      %868 = vmatmul.mubr.bf16.gmra.mxu0 %v277
      %v869 = vpop.f32.mrf.mxu0
      %v870 = vadd.f32 0.0, %v869
      %v871 = vpop.f32.mrf.mxu0
      %v872 = vpop.f32.mrf.mxu0
      %v873 = vadd.f32 0.0, %v872
      %v874 = vpop.f32.mrf.mxu0
      %875 = vmatprep.mubr.bf16.mxu0 0
      %876 = vmatmul.mubr.bf16.gmra.mxu0 %v278
      %v877 = vpop.f32.mrf.mxu0
      %v878 = vadd.f32 0.0, %v877
      %v879 = vpop.f32.mrf.mxu0
      %v880 = vpop.f32.mrf.mxu0
      %v881 = vadd.f32 0.0, %v880
      %v882 = vpop.f32.mrf.mxu0
      %883 = vmatprep.mubr.bf16.mxu0 0
      %884 = vmatmul.mubr.bf16.gmra.mxu0 %v279
      %v885 = vpop.f32.mrf.mxu0
      %v886 = vadd.f32 0.0, %v885
      %v887 = vpop.f32.mrf.mxu0
      %v888 = vpop.f32.mrf.mxu0
      %v889 = vadd.f32 0.0, %v888
      %v890 = vpop.f32.mrf.mxu0
      %891 = vmatprep.mubr.bf16.mxu0 0
      %892 = vmatmul.mubr.bf16.gmra.mxu0 %v280
      %v893 = vpop.f32.mrf.mxu0
      %v894 = vadd.f32 0.0, %v893
      %v895 = vpop.f32.mrf.mxu0
      %v896 = vpop.f32.mrf.mxu0
      %v897 = vadd.f32 0.0, %v896
      %v898 = vpop.f32.mrf.mxu0
      %899 = vmatprep.mubr.bf16.mxu0 0
      %900 = vmatmul.mubr.bf16.gmra.mxu0 %v281
      %v901 = vpop.f32.mrf.mxu0
      %v902 = vadd.f32 0.0, %v901
      %v903 = vpop.f32.mrf.mxu0
      %v904 = vpop.f32.mrf.mxu0
      %v905 = vadd.f32 0.0, %v904
      %v906 = vpop.f32.mrf.mxu0
      %907 = vmatprep.mubr.bf16.mxu0 0
      %908 = vmatmul.mubr.bf16.gmra.mxu0 %v282
      %v909 = vpop.f32.mrf.mxu0
      %v910 = vadd.f32 0.0, %v909
      %v911 = vpop.f32.mrf.mxu0
      %v912 = vpop.f32.mrf.mxu0
      %v913 = vadd.f32 0.0, %v912
      %v914 = vpop.f32.mrf.mxu0
      %915 = vmatprep.mubr.bf16.mxu0 0
      %916 = vmatmul.mubr.bf16.gmra.mxu0 %v283
      %v917 = vpop.f32.mrf.mxu0
      %v918 = vadd.f32 0.0, %v917
      %v919 = vpop.f32.mrf.mxu0
      %v920 = vpop.f32.mrf.mxu0
      %v921 = vadd.f32 0.0, %v920
      %v922 = vpop.f32.mrf.mxu0
      %923 = vmatprep.mubr.bf16.mxu0 0
      %924 = vmatmul.mubr.bf16.gmra.mxu0 %v284
      %v925 = vpop.f32.mrf.mxu0
      %v926 = vadd.f32 0.0, %v925
      %v927 = vpop.f32.mrf.mxu0
      %v928 = vpop.f32.mrf.mxu0
      %v929 = vadd.f32 0.0, %v928
      %v930 = vpop.f32.mrf.mxu0
      %931 = vmatprep.mubr.bf16.mxu0 0
      %932 = vmatmul.mubr.bf16.gmra.mxu0 %v285
      %v933 = vpop.f32.mrf.mxu0
      %v934 = vadd.f32 0.0, %v933
      %v935 = vpop.f32.mrf.mxu0
      %v936 = vpop.f32.mrf.mxu0
      %v937 = vadd.f32 0.0, %v936
      %v938 = vpop.f32.mrf.mxu0
      %939 = vmatprep.mubr.bf16.mxu0 0
      %940 = vmatmul.mubr.bf16.gmra.mxu0 %v286
      %v941 = vpop.f32.mrf.mxu0
      %v942 = vadd.f32 0.0, %v941
      %v943 = vpop.f32.mrf.mxu0
      %v944 = vpop.f32.mrf.mxu0
      %v945 = vadd.f32 0.0, %v944
      %v946 = vpop.f32.mrf.mxu0
      %947 = vmatprep.mubr.bf16.mxu0 0
      %948 = vmatmul.mubr.bf16.gmra.mxu0 %v287
      %v949 = vpop.f32.mrf.mxu0
      %v950 = vadd.f32 0.0, %v949
      %v951 = vpop.f32.mrf.mxu0
      %v952 = vpop.f32.mrf.mxu0
      %v953 = vadd.f32 0.0, %v952
      %v954 = vpop.f32.mrf.mxu0
      %955 = vmatprep.mubr.bf16.mxu0 0
      %956 = vmatmul.mubr.bf16.gmra.mxu0 %v288
      %v957 = vpop.f32.mrf.mxu0
      %v958 = vadd.f32 0.0, %v957
      %v959 = vpop.f32.mrf.mxu0
      %v960 = vpop.f32.mrf.mxu0
      %v961 = vadd.f32 0.0, %v960
      %v962 = vpop.f32.mrf.mxu0
      %963 = vdwg.mxu0
      %v964 = vrot.slane %v388, 7
      %v965 = vrot.slane %v391, 7
      %v966 = vrot.slane %v396, 7
      %v967 = vrot.slane %v399, 7
      %v968 = vrot.slane %v404, 7
      %v969 = vrot.slane %v407, 7
      %v970 = vrot.slane %v412, 7
      %v971 = vrot.slane %v415, 7
      %v972 = vrot.slane %v420, 7
      %v973 = vrot.slane %v423, 7
      %v974 = vrot.slane %v428, 7
      %v975 = vrot.slane %v431, 7
      %v976 = vrot.slane %v436, 7
      %v977 = vrot.slane %v439, 7
      %v978 = vrot.slane %v444, 7
      %v979 = vrot.slane %v447, 7
      %v980 = vrot.slane %v452, 7
      %v981 = vrot.slane %v455, 7
      %v982 = vrot.slane %v460, 7
      %v983 = vrot.slane %v463, 7
      %v984 = vrot.slane %v468, 7
      %v985 = vrot.slane %v471, 7
      %v986 = vrot.slane %v476, 7
      %v987 = vrot.slane %v479, 7
      %v988 = vrot.slane %v484, 7
      %v989 = vrot.slane %v487, 7
      %v990 = vrot.slane %v492, 7
      %v991 = vrot.slane %v495, 7
      %v992 = vrot.slane %v500, 7
      %v993 = vrot.slane %v503, 7
      %v994 = vrot.slane %v508, 7
      %v995 = vrot.slane %v511, 7
      %vm996 = vcmp.lt.s32.totalorder %v235, 1
      %v997 = vsel %vm996, %v994, %v995
      %v998 = vsel %vm996, %v993, %v994
      %v999 = vsel %vm996, %v992, %v993
      %v1000 = vsel %vm996, %v991, %v992
      %v1001 = vsel %vm996, %v990, %v991
      %v1002 = vsel %vm996, %v989, %v990
      %v1003 = vsel %vm996, %v988, %v989
      %v1004 = vsel %vm996, %v987, %v988
      %v1005 = vsel %vm996, %v986, %v987
      %v1006 = vsel %vm996, %v985, %v986
      %v1007 = vsel %vm996, %v984, %v985
      %v1008 = vsel %vm996, %v983, %v984
      %v1009 = vsel %vm996, %v982, %v983
      %v1010 = vsel %vm996, %v981, %v982
      %v1011 = vsel %vm996, %v980, %v981
      %v1012 = vsel %vm996, %v979, %v980
      %v1013 = vsel %vm996, %v978, %v979
      %v1014 = vsel %vm996, %v977, %v978
      %v1015 = vsel %vm996, %v976, %v977
      %v1016 = vsel %vm996, %v975, %v976
      %v1017 = vsel %vm996, %v974, %v975
      %v1018 = vsel %vm996, %v973, %v974
      %v1019 = vsel %vm996, %v972, %v973
      %v1020 = vsel %vm996, %v971, %v972
      %v1021 = vsel %vm996, %v970, %v971
      %v1022 = vsel %vm996, %v969, %v970
      %v1023 = vsel %vm996, %v968, %v969
      %v1024 = vsel %vm996, %v967, %v968
      %v1025 = vsel %vm996, %v966, %v967
      %v1026 = vsel %vm996, %v965, %v966
      %v1027 = vsel %vm996, %v964, %v965
      %v1028 = vsel %vm996, %v995, %v964
      %v1029 = vsel %vm237, %v1028, 0.0
      %v1030 = vsel %vm238, %v1027, 0.0
      %v1031 = vsel %vm237, %v1026, 0.0
      %v1032 = vsel %vm238, %v1025, 0.0
      %v1033 = vsel %vm237, %v1024, 0.0
      %v1034 = vsel %vm238, %v1023, 0.0
      %v1035 = vsel %vm237, %v1022, 0.0
      %v1036 = vsel %vm238, %v1021, 0.0
      %v1037 = vsel %vm237, %v1020, 0.0
      %v1038 = vsel %vm238, %v1019, 0.0
      %v1039 = vsel %vm237, %v1018, 0.0
      %v1040 = vsel %vm238, %v1017, 0.0
      %v1041 = vsel %vm237, %v1016, 0.0
      %v1042 = vsel %vm238, %v1015, 0.0
      %v1043 = vsel %vm237, %v1014, 0.0
      %v1044 = vsel %vm238, %v1013, 0.0
      %v1045 = vsel %vm237, %v1012, 0.0
      %v1046 = vsel %vm238, %v1011, 0.0
      %v1047 = vsel %vm237, %v1010, 0.0
      %v1048 = vsel %vm238, %v1009, 0.0
      %v1049 = vsel %vm237, %v1008, 0.0
      %v1050 = vsel %vm238, %v1007, 0.0
      %v1051 = vsel %vm237, %v1006, 0.0
      %v1052 = vsel %vm238, %v1005, 0.0
      %v1053 = vsel %vm237, %v1004, 0.0
      %v1054 = vsel %vm238, %v1003, 0.0
      %v1055 = vsel %vm237, %v1002, 0.0
      %v1056 = vsel %vm238, %v1001, 0.0
      %v1057 = vsel %vm237, %v1000, 0.0
      %v1058 = vsel %vm238, %v999, 0.0
      %v1059 = vsel %vm237, %v998, 0.0
      %v1060 = vsel %vm238, %v997, 0.0
      %v1061 = vrot.slane %v838, 1
      %v1062 = vrot.slane %v841, 1
      %v1063 = vrot.slane %v846, 1
      %v1064 = vrot.slane %v849, 1
      %v1065 = vrot.slane %v854, 1
      %v1066 = vrot.slane %v857, 1
      %v1067 = vrot.slane %v862, 1
      %v1068 = vrot.slane %v865, 1
      %v1069 = vrot.slane %v870, 1
      %v1070 = vrot.slane %v873, 1
      %v1071 = vrot.slane %v878, 1
      %v1072 = vrot.slane %v881, 1
      %v1073 = vrot.slane %v886, 1
      %v1074 = vrot.slane %v889, 1
      %v1075 = vrot.slane %v894, 1
      %v1076 = vrot.slane %v897, 1
      %v1077 = vrot.slane %v902, 1
      %v1078 = vrot.slane %v905, 1
      %v1079 = vrot.slane %v910, 1
      %v1080 = vrot.slane %v913, 1
      %v1081 = vrot.slane %v918, 1
      %v1082 = vrot.slane %v921, 1
      %v1083 = vrot.slane %v926, 1
      %v1084 = vrot.slane %v929, 1
      %v1085 = vrot.slane %v934, 1
      %v1086 = vrot.slane %v937, 1
      %v1087 = vrot.slane %v942, 1
      %v1088 = vrot.slane %v945, 1
      %v1089 = vrot.slane %v950, 1
      %v1090 = vrot.slane %v953, 1
      %v1091 = vrot.slane %v958, 1
      %v1092 = vrot.slane %v961, 1
      %vm1093 = vcmp.lt.s32.totalorder %v235, 7
      %v1094 = vsel %vm1093, %v1091, %v1092
      %v1095 = vsel %vm1093, %v1090, %v1091
      %v1096 = vsel %vm1093, %v1089, %v1090
      %v1097 = vsel %vm1093, %v1088, %v1089
      %v1098 = vsel %vm1093, %v1087, %v1088
      %v1099 = vsel %vm1093, %v1086, %v1087
      %v1100 = vsel %vm1093, %v1085, %v1086
      %v1101 = vsel %vm1093, %v1084, %v1085
      %v1102 = vsel %vm1093, %v1083, %v1084
      %v1103 = vsel %vm1093, %v1082, %v1083
      %v1104 = vsel %vm1093, %v1081, %v1082
      %v1105 = vsel %vm1093, %v1080, %v1081
      %v1106 = vsel %vm1093, %v1079, %v1080
      %v1107 = vsel %vm1093, %v1078, %v1079
      %v1108 = vsel %vm1093, %v1077, %v1078
      %v1109 = vsel %vm1093, %v1076, %v1077
      %v1110 = vsel %vm1093, %v1075, %v1076
      %v1111 = vsel %vm1093, %v1074, %v1075
      %v1112 = vsel %vm1093, %v1073, %v1074
      %v1113 = vsel %vm1093, %v1072, %v1073
      %v1114 = vsel %vm1093, %v1071, %v1072
      %v1115 = vsel %vm1093, %v1070, %v1071
      %v1116 = vsel %vm1093, %v1069, %v1070
      %v1117 = vsel %vm1093, %v1068, %v1069
      %v1118 = vsel %vm1093, %v1067, %v1068
      %v1119 = vsel %vm1093, %v1066, %v1067
      %v1120 = vsel %vm1093, %v1065, %v1066
      %v1121 = vsel %vm1093, %v1064, %v1065
      %v1122 = vsel %vm1093, %v1063, %v1064
      %v1123 = vsel %vm1093, %v1062, %v1063
      %v1124 = vsel %vm1093, %v1061, %v1062
      %v1125 = vsel %vm1093, %v1092, %v1061
      %v1126 = vsel %vm239, %v1124, 0.0
      %v1127 = vsel %vm240, %v1123, 0.0
      %v1128 = vsel %vm239, %v1122, 0.0
      %v1129 = vsel %vm240, %v1121, 0.0
      %v1130 = vsel %vm239, %v1120, 0.0
      %v1131 = vsel %vm240, %v1119, 0.0
      %v1132 = vsel %vm239, %v1118, 0.0
      %v1133 = vsel %vm240, %v1117, 0.0
      %v1134 = vsel %vm239, %v1116, 0.0
      %v1135 = vsel %vm240, %v1115, 0.0
      %v1136 = vsel %vm239, %v1114, 0.0
      %v1137 = vsel %vm240, %v1113, 0.0
      %v1138 = vsel %vm239, %v1112, 0.0
      %v1139 = vsel %vm240, %v1111, 0.0
      %v1140 = vsel %vm239, %v1110, 0.0
      %v1141 = vsel %vm240, %v1109, 0.0
      %v1142 = vsel %vm239, %v1108, 0.0
      %v1143 = vsel %vm240, %v1107, 0.0
      %v1144 = vsel %vm239, %v1106, 0.0
      %v1145 = vsel %vm240, %v1105, 0.0
      %v1146 = vsel %vm239, %v1104, 0.0
      %v1147 = vsel %vm240, %v1103, 0.0
      %v1148 = vsel %vm239, %v1102, 0.0
      %v1149 = vsel %vm240, %v1101, 0.0
      %v1150 = vsel %vm239, %v1100, 0.0
      %v1151 = vsel %vm240, %v1099, 0.0
      %v1152 = vsel %vm239, %v1098, 0.0
      %v1153 = vsel %vm240, %v1097, 0.0
      %v1154 = vsel %vm239, %v1096, 0.0
      %v1155 = vsel %vm240, %v1095, 0.0
      %v1156 = vsel %vm239, %v1094, 0.0
      %v1157 = vsel %vm240, %v1125, 0.0
      %v1158 = vadd.f32 %v1029, %v613
      %v1159 = vadd.f32 %v1030, %v616
      %v1160 = vadd.f32 %v1031, %v621
      %v1161 = vadd.f32 %v1032, %v624
      %v1162 = vadd.f32 %v1033, %v629
      %v1163 = vadd.f32 %v1034, %v632
      %v1164 = vadd.f32 %v1035, %v637
      %v1165 = vadd.f32 %v1036, %v640
      %v1166 = vadd.f32 %v1037, %v645
      %v1167 = vadd.f32 %v1038, %v648
      %v1168 = vadd.f32 %v1039, %v653
      %v1169 = vadd.f32 %v1040, %v656
      %v1170 = vadd.f32 %v1041, %v661
      %v1171 = vadd.f32 %v1042, %v664
      %v1172 = vadd.f32 %v1043, %v669
      %v1173 = vadd.f32 %v1044, %v672
      %v1174 = vadd.f32 %v1045, %v677
      %v1175 = vadd.f32 %v1046, %v680
      %v1176 = vadd.f32 %v1047, %v685
      %v1177 = vadd.f32 %v1048, %v688
      %v1178 = vadd.f32 %v1049, %v693
      %v1179 = vadd.f32 %v1050, %v696
      %v1180 = vadd.f32 %v1051, %v701
      %v1181 = vadd.f32 %v1052, %v704
      %v1182 = vadd.f32 %v1053, %v709
      %v1183 = vadd.f32 %v1054, %v712
      %v1184 = vadd.f32 %v1055, %v717
      %v1185 = vadd.f32 %v1056, %v720
      %v1186 = vadd.f32 %v1057, %v725
      %v1187 = vadd.f32 %v1058, %v728
      %v1188 = vadd.f32 %v1059, %v733
      %v1189 = vadd.f32 %v1060, %v736
      %v1190 = vadd.f32 %v1158, %v1126
      %v1191 = vadd.f32 %v1159, %v1127
      %v1192 = vadd.f32 %v1160, %v1128
      %v1193 = vadd.f32 %v1161, %v1129
      %v1194 = vadd.f32 %v1162, %v1130
      %v1195 = vadd.f32 %v1163, %v1131
      %v1196 = vadd.f32 %v1164, %v1132
      %v1197 = vadd.f32 %v1165, %v1133
      %v1198 = vadd.f32 %v1166, %v1134
      %v1199 = vadd.f32 %v1167, %v1135
      %v1200 = vadd.f32 %v1168, %v1136
      %v1201 = vadd.f32 %v1169, %v1137
      %v1202 = vadd.f32 %v1170, %v1138
      %v1203 = vadd.f32 %v1171, %v1139
      %v1204 = vadd.f32 %v1172, %v1140
      %v1205 = vadd.f32 %v1173, %v1141
      %v1206 = vadd.f32 %v1174, %v1142
      %v1207 = vadd.f32 %v1175, %v1143
      %v1208 = vadd.f32 %v1176, %v1144
      %v1209 = vadd.f32 %v1177, %v1145
      %v1210 = vadd.f32 %v1178, %v1146
      %v1211 = vadd.f32 %v1179, %v1147
      %v1212 = vadd.f32 %v1180, %v1148
      %v1213 = vadd.f32 %v1181, %v1149
      %v1214 = vadd.f32 %v1182, %v1150
      %v1215 = vadd.f32 %v1183, %v1151
      %v1216 = vadd.f32 %v1184, %v1152
      %v1217 = vadd.f32 %v1185, %v1153
      %v1218 = vadd.f32 %v1186, %v1154
      %v1219 = vadd.f32 %v1187, %v1155
      %v1220 = vadd.f32 %v1188, %v1156
      %v1221 = vadd.f32 %v1189, %v1157
      %v1222 = vld [vmem:[%s2] sm:$0x1]
      %v1224 = vlaneseq
      %v1225 = vshrl.u32 %v1224, 7
      %v1226 = vsub.s32 0, %v1225
      %v1227 = vrot.slane %v1222, %v1226
      %v1229 = vadd.f32 %v1190, %v1227
      %v1230 = vadd.f32 %v1191, %v1227
      %v1231 = vadd.f32 %v1192, %v1227
      %v1232 = vadd.f32 %v1193, %v1227
      %v1233 = vadd.f32 %v1194, %v1227
      %v1234 = vadd.f32 %v1195, %v1227
      %v1235 = vadd.f32 %v1196, %v1227
      %v1236 = vadd.f32 %v1197, %v1227
      %v1237 = vadd.f32 %v1198, %v1227
      %v1238 = vadd.f32 %v1199, %v1227
      %v1239 = vadd.f32 %v1200, %v1227
      %v1240 = vadd.f32 %v1201, %v1227
      %v1241 = vadd.f32 %v1202, %v1227
      %v1242 = vadd.f32 %v1203, %v1227
      %v1243 = vadd.f32 %v1204, %v1227
      %v1244 = vadd.f32 %v1205, %v1227
      %v1245 = vadd.f32 %v1206, %v1227
      %v1246 = vadd.f32 %v1207, %v1227
      %v1247 = vadd.f32 %v1208, %v1227
      %v1248 = vadd.f32 %v1209, %v1227
      %v1249 = vadd.f32 %v1210, %v1227
      %v1250 = vadd.f32 %v1211, %v1227
      %v1251 = vadd.f32 %v1212, %v1227
      %v1252 = vadd.f32 %v1213, %v1227
      %v1253 = vadd.f32 %v1214, %v1227
      %v1254 = vadd.f32 %v1215, %v1227
      %v1255 = vadd.f32 %v1216, %v1227
      %v1256 = vadd.f32 %v1217, %v1227
      %v1257 = vadd.f32 %v1218, %v1227
      %v1258 = vadd.f32 %v1219, %v1227
      %v1259 = vadd.f32 %v1220, %v1227
      %v1260 = vadd.f32 %v1221, %v1227
      %v1261 = vmax.f32 %v1229, 0.0
      %v1262 = vmax.f32 %v1230, 0.0
      %v1263 = vmax.f32 %v1231, 0.0
      %v1264 = vmax.f32 %v1232, 0.0
      %v1265 = vmax.f32 %v1233, 0.0
      %v1266 = vmax.f32 %v1234, 0.0
      %v1267 = vmax.f32 %v1235, 0.0
      %v1268 = vmax.f32 %v1236, 0.0
      %v1269 = vmax.f32 %v1237, 0.0
      %v1270 = vmax.f32 %v1238, 0.0
      %v1271 = vmax.f32 %v1239, 0.0
      %v1272 = vmax.f32 %v1240, 0.0
      %v1273 = vmax.f32 %v1241, 0.0
      %v1274 = vmax.f32 %v1242, 0.0
      %v1275 = vmax.f32 %v1243, 0.0
      %v1276 = vmax.f32 %v1244, 0.0
      %v1277 = vmax.f32 %v1245, 0.0
      %v1278 = vmax.f32 %v1246, 0.0
      %v1279 = vmax.f32 %v1247, 0.0
      %v1280 = vmax.f32 %v1248, 0.0
      %v1281 = vmax.f32 %v1249, 0.0
      %v1282 = vmax.f32 %v1250, 0.0
      %v1283 = vmax.f32 %v1251, 0.0
      %v1284 = vmax.f32 %v1252, 0.0
      %v1285 = vmax.f32 %v1253, 0.0
      %v1286 = vmax.f32 %v1254, 0.0
      %v1287 = vmax.f32 %v1255, 0.0
      %v1288 = vmax.f32 %v1256, 0.0
      %v1289 = vmax.f32 %v1257, 0.0
      %v1290 = vmax.f32 %v1258, 0.0
      %v1291 = vmax.f32 %v1259, 0.0
      %v1292 = vmax.f32 %v1260, 0.0
      %v1293 = vpack.c.bf16 %v1262, %v1261
      %v1294 = vpack.c.bf16 %v1264, %v1263
      %v1295 = vpack.c.bf16 %v1266, %v1265
      %v1296 = vpack.c.bf16 %v1268, %v1267
      %v1297 = vpack.c.bf16 %v1270, %v1269
      %v1298 = vpack.c.bf16 %v1272, %v1271
      %v1299 = vpack.c.bf16 %v1274, %v1273
      %v1300 = vpack.c.bf16 %v1276, %v1275
      %v1301 = vpack.c.bf16 %v1278, %v1277
      %v1302 = vpack.c.bf16 %v1280, %v1279
      %v1303 = vpack.c.bf16 %v1282, %v1281
      %v1304 = vpack.c.bf16 %v1284, %v1283
      %v1305 = vpack.c.bf16 %v1286, %v1285
      %v1306 = vpack.c.bf16 %v1288, %v1287
      %v1307 = vpack.c.bf16 %v1290, %v1289
      %v1308 = vpack.c.bf16 %v1292, %v1291
      %v1309 = vld [vmem:[%s3] sm:$0xf]
      %v1310 = vld [vmem:[%s3 + $0x4] sm:$0xf]
      %v1311 = vld [vmem:[%s3 + $0x8] sm:$0xf]
      %v1312 = vld [vmem:[%s3 + $0xc] sm:$0xf]
      %v1313 = vld [vmem:[%s3 + $0x10] sm:$0xf]
      %v1314 = vld [vmem:[%s3 + $0x14] sm:$0xf]
      %v1315 = vld [vmem:[%s3 + $0x18] sm:$0xf]
      %v1316 = vld [vmem:[%s3 + $0x1c] sm:$0xf]
      %v1317 = vld [vmem:[%s3 + $0x20] sm:$0xf]
      %v1318 = vld [vmem:[%s3 + $0x24] sm:$0xf]
      %v1319 = vld [vmem:[%s3 + $0x28] sm:$0xf]
      %v1320 = vld [vmem:[%s3 + $0x2c] sm:$0xf]
      %v1321 = vld [vmem:[%s3 + $0x30] sm:$0xf]
      %v1322 = vld [vmem:[%s3 + $0x34] sm:$0xf]
      %v1323 = vld [vmem:[%s3 + $0x38] sm:$0xf]
      %v1324 = vld [vmem:[%s3 + $0x3c] sm:$0xf]
      %v1341 = vunpack.c.l.b16 %v1309
      %v1342 = vunpack.c.l.b16 %v1310
      %v1343 = vunpack.c.l.b16 %v1311
      %v1344 = vunpack.c.l.b16 %v1312
      %v1345 = vunpack.c.l.b16 %v1313
      %v1346 = vunpack.c.l.b16 %v1314
      %v1347 = vunpack.c.l.b16 %v1315
      %v1348 = vunpack.c.l.b16 %v1316
      %v1349 = vunpack.c.l.b16 %v1317
      %v1350 = vunpack.c.l.b16 %v1318
      %v1351 = vunpack.c.l.b16 %v1319
      %v1352 = vunpack.c.l.b16 %v1320
      %v1353 = vunpack.c.l.b16 %v1321
      %v1354 = vunpack.c.l.b16 %v1322
      %v1355 = vunpack.c.l.b16 %v1323
      %v1356 = vunpack.c.l.b16 %v1324
      %v1357 = vpack.c.b16 %v1342, %v1341
      %v1358 = vpack.c.b16 %v1344, %v1343
      %v1359 = vpack.c.b16 %v1346, %v1345
      %v1360 = vpack.c.b16 %v1348, %v1347
      %v1361 = vpack.c.b16 %v1350, %v1349
      %v1362 = vpack.c.b16 %v1352, %v1351
      %v1363 = vpack.c.b16 %v1354, %v1353
      %v1364 = vpack.c.b16 %v1356, %v1355
      %1373 = vmatprep.subr.bf16.mxu0 0
      %1374 = vmatpush1.bf16.msra.mxu0 %v1364
      %1375 = vmatprep.subr.bf16.mxu0 0
      %1376 = vmatpush1.bf16.msra.mxu0 %v1363
      %1377 = vmatprep.subr.bf16.mxu0 0
      %1378 = vmatpush1.bf16.msra.mxu0 %v1362
      %1379 = vmatprep.subr.bf16.mxu0 0
      %1380 = vmatpush1.bf16.msra.mxu0 %v1361
      %1381 = vmatprep.subr.bf16.mxu0 0
      %1382 = vmatpush1.bf16.msra.mxu0 %v1360
      %1383 = vmatprep.subr.bf16.mxu0 0
      %1384 = vmatpush1.bf16.msra.mxu0 %v1359
      %1385 = vmatprep.subr.bf16.mxu0 0
      %1386 = vmatpush1.bf16.msra.mxu0 %v1358
      %1387 = vmatprep.subr.bf16.mxu0 0
      %1388 = vmatpush1.bf16.msra.mxu0 %v1357
      %1389 = vmatprep.subr.bf16.mxu0 0
      %1390 = vmatpush2.bf16.msra.mxu0 0
      %1391 = vmatprep.subr.bf16.mxu0 0
      %1392 = vmatpush2.bf16.msra.mxu0 0
      %1393 = vmatprep.subr.bf16.mxu0 0
      %1394 = vmatpush2.bf16.msra.mxu0 0
      %1395 = vmatprep.subr.bf16.mxu0 0
      %1396 = vmatpush2.bf16.msra.mxu0 0
      %1397 = vmatprep.subr.bf16.mxu0 0
      %1398 = vmatpush2.bf16.msra.mxu0 0
      %1399 = vmatprep.subr.bf16.mxu0 0
      %1400 = vmatpush2.bf16.msra.mxu0 0
      %1401 = vmatprep.subr.bf16.mxu0 0
      %1402 = vmatpush2.bf16.msra.mxu0 0
      %1403 = vmatprep.subr.bf16.mxu0 0
      %1404 = vmatpush2.bf16.msra.mxu0 0
      %1405 = vmatprep.mubr.bf16.mxu0 0
      %1406 = vmatmul.mubr.bf16.gmra.mxu0 %v1293
      %v1407 = vpop.f32.mrf.mxu0
      %v1408 = vadd.f32 0.0, %v1407
      %v1409 = vpop.f32.mrf.mxu0
      %v1410 = vpop.f32.mrf.mxu0
      %v1411 = vadd.f32 0.0, %v1410
      %v1412 = vpop.f32.mrf.mxu0
      %1413 = vmatprep.mubr.bf16.mxu0 0
      %1414 = vmatmul.mubr.bf16.gmra.mxu0 %v1294
      %v1415 = vpop.f32.mrf.mxu0
      %v1416 = vadd.f32 0.0, %v1415
      %v1417 = vpop.f32.mrf.mxu0
      %v1418 = vpop.f32.mrf.mxu0
      %v1419 = vadd.f32 0.0, %v1418
      %v1420 = vpop.f32.mrf.mxu0
      %1421 = vmatprep.mubr.bf16.mxu0 0
      %1422 = vmatmul.mubr.bf16.gmra.mxu0 %v1295
      %v1423 = vpop.f32.mrf.mxu0
      %v1424 = vadd.f32 0.0, %v1423
      %v1425 = vpop.f32.mrf.mxu0
      %v1426 = vpop.f32.mrf.mxu0
      %v1427 = vadd.f32 0.0, %v1426
      %v1428 = vpop.f32.mrf.mxu0
      %1429 = vmatprep.mubr.bf16.mxu0 0
      %1430 = vmatmul.mubr.bf16.gmra.mxu0 %v1296
      %v1431 = vpop.f32.mrf.mxu0
      %v1432 = vadd.f32 0.0, %v1431
      %v1433 = vpop.f32.mrf.mxu0
      %v1434 = vpop.f32.mrf.mxu0
      %v1435 = vadd.f32 0.0, %v1434
      %v1436 = vpop.f32.mrf.mxu0
      %1437 = vmatprep.mubr.bf16.mxu0 0
      %1438 = vmatmul.mubr.bf16.gmra.mxu0 %v1297
      %v1439 = vpop.f32.mrf.mxu0
      %v1440 = vadd.f32 0.0, %v1439
      %v1441 = vpop.f32.mrf.mxu0
      %v1442 = vpop.f32.mrf.mxu0
      %v1443 = vadd.f32 0.0, %v1442
      %v1444 = vpop.f32.mrf.mxu0
      %1445 = vmatprep.mubr.bf16.mxu0 0
      %1446 = vmatmul.mubr.bf16.gmra.mxu0 %v1298
      %v1447 = vpop.f32.mrf.mxu0
      %v1448 = vadd.f32 0.0, %v1447
      %v1449 = vpop.f32.mrf.mxu0
      %v1450 = vpop.f32.mrf.mxu0
      %v1451 = vadd.f32 0.0, %v1450
      %v1452 = vpop.f32.mrf.mxu0
      %1453 = vmatprep.mubr.bf16.mxu0 0
      %1454 = vmatmul.mubr.bf16.gmra.mxu0 %v1299
      %v1455 = vpop.f32.mrf.mxu0
      %v1456 = vadd.f32 0.0, %v1455
      %v1457 = vpop.f32.mrf.mxu0
      %v1458 = vpop.f32.mrf.mxu0
      %v1459 = vadd.f32 0.0, %v1458
      %v1460 = vpop.f32.mrf.mxu0
      %1461 = vmatprep.mubr.bf16.mxu0 0
      %1462 = vmatmul.mubr.bf16.gmra.mxu0 %v1300
      %v1463 = vpop.f32.mrf.mxu0
      %v1464 = vadd.f32 0.0, %v1463
      %v1465 = vpop.f32.mrf.mxu0
      %v1466 = vpop.f32.mrf.mxu0
      %v1467 = vadd.f32 0.0, %v1466
      %v1468 = vpop.f32.mrf.mxu0
      %1469 = vmatprep.mubr.bf16.mxu0 0
      %1470 = vmatmul.mubr.bf16.gmra.mxu0 %v1301
      %v1471 = vpop.f32.mrf.mxu0
      %v1472 = vadd.f32 0.0, %v1471
      %v1473 = vpop.f32.mrf.mxu0
      %v1474 = vpop.f32.mrf.mxu0
      %v1475 = vadd.f32 0.0, %v1474
      %v1476 = vpop.f32.mrf.mxu0
      %1477 = vmatprep.mubr.bf16.mxu0 0
      %1478 = vmatmul.mubr.bf16.gmra.mxu0 %v1302
      %v1479 = vpop.f32.mrf.mxu0
      %v1480 = vadd.f32 0.0, %v1479
      %v1481 = vpop.f32.mrf.mxu0
      %v1482 = vpop.f32.mrf.mxu0
      %v1483 = vadd.f32 0.0, %v1482
      %v1484 = vpop.f32.mrf.mxu0
      %1485 = vmatprep.mubr.bf16.mxu0 0
      %1486 = vmatmul.mubr.bf16.gmra.mxu0 %v1303
      %v1487 = vpop.f32.mrf.mxu0
      %v1488 = vadd.f32 0.0, %v1487
      %v1489 = vpop.f32.mrf.mxu0
      %v1490 = vpop.f32.mrf.mxu0
      %v1491 = vadd.f32 0.0, %v1490
      %v1492 = vpop.f32.mrf.mxu0
      %1493 = vmatprep.mubr.bf16.mxu0 0
      %1494 = vmatmul.mubr.bf16.gmra.mxu0 %v1304
      %v1495 = vpop.f32.mrf.mxu0
      %v1496 = vadd.f32 0.0, %v1495
      %v1497 = vpop.f32.mrf.mxu0
      %v1498 = vpop.f32.mrf.mxu0
      %v1499 = vadd.f32 0.0, %v1498
      %v1500 = vpop.f32.mrf.mxu0
      %1501 = vmatprep.mubr.bf16.mxu0 0
      %1502 = vmatmul.mubr.bf16.gmra.mxu0 %v1305
      %v1503 = vpop.f32.mrf.mxu0
      %v1504 = vadd.f32 0.0, %v1503
      %v1505 = vpop.f32.mrf.mxu0
      %v1506 = vpop.f32.mrf.mxu0
      %v1507 = vadd.f32 0.0, %v1506
      %v1508 = vpop.f32.mrf.mxu0
      %1509 = vmatprep.mubr.bf16.mxu0 0
      %1510 = vmatmul.mubr.bf16.gmra.mxu0 %v1306
      %v1511 = vpop.f32.mrf.mxu0
      %v1512 = vadd.f32 0.0, %v1511
      %v1513 = vpop.f32.mrf.mxu0
      %v1514 = vpop.f32.mrf.mxu0
      %v1515 = vadd.f32 0.0, %v1514
      %v1516 = vpop.f32.mrf.mxu0
      %1517 = vmatprep.mubr.bf16.mxu0 0
      %1518 = vmatmul.mubr.bf16.gmra.mxu0 %v1307
      %v1519 = vpop.f32.mrf.mxu0
      %v1520 = vadd.f32 0.0, %v1519
      %v1521 = vpop.f32.mrf.mxu0
      %v1522 = vpop.f32.mrf.mxu0
      %v1523 = vadd.f32 0.0, %v1522
      %v1524 = vpop.f32.mrf.mxu0
      %1525 = vmatprep.mubr.bf16.mxu0 0
      %1526 = vmatmul.mubr.bf16.gmra.mxu0 %v1308
      %v1527 = vpop.f32.mrf.mxu0
      %v1528 = vadd.f32 0.0, %v1527
      %v1529 = vpop.f32.mrf.mxu0
      %v1530 = vpop.f32.mrf.mxu0
      %v1531 = vadd.f32 0.0, %v1530
      %v1532 = vpop.f32.mrf.mxu0
      %1533 = vdwg.mxu0
      %v1534 = vld [vmem:[%s3 + $0x40] sm:$0xf]
      %v1535 = vld [vmem:[%s3 + $0x44] sm:$0xf]
      %v1536 = vld [vmem:[%s3 + $0x48] sm:$0xf]
      %v1537 = vld [vmem:[%s3 + $0x4c] sm:$0xf]
      %v1538 = vld [vmem:[%s3 + $0x50] sm:$0xf]
      %v1539 = vld [vmem:[%s3 + $0x54] sm:$0xf]
      %v1540 = vld [vmem:[%s3 + $0x58] sm:$0xf]
      %v1541 = vld [vmem:[%s3 + $0x5c] sm:$0xf]
      %v1542 = vld [vmem:[%s3 + $0x60] sm:$0xf]
      %v1543 = vld [vmem:[%s3 + $0x64] sm:$0xf]
      %v1544 = vld [vmem:[%s3 + $0x68] sm:$0xf]
      %v1545 = vld [vmem:[%s3 + $0x6c] sm:$0xf]
      %v1546 = vld [vmem:[%s3 + $0x70] sm:$0xf]
      %v1547 = vld [vmem:[%s3 + $0x74] sm:$0xf]
      %v1548 = vld [vmem:[%s3 + $0x78] sm:$0xf]
      %v1549 = vld [vmem:[%s3 + $0x7c] sm:$0xf]
      %v1566 = vunpack.c.l.b16 %v1534
      %v1567 = vunpack.c.l.b16 %v1535
      %v1568 = vunpack.c.l.b16 %v1536
      %v1569 = vunpack.c.l.b16 %v1537
      %v1570 = vunpack.c.l.b16 %v1538
      %v1571 = vunpack.c.l.b16 %v1539
      %v1572 = vunpack.c.l.b16 %v1540
      %v1573 = vunpack.c.l.b16 %v1541
      %v1574 = vunpack.c.l.b16 %v1542
      %v1575 = vunpack.c.l.b16 %v1543
      %v1576 = vunpack.c.l.b16 %v1544
      %v1577 = vunpack.c.l.b16 %v1545
      %v1578 = vunpack.c.l.b16 %v1546
      %v1579 = vunpack.c.l.b16 %v1547
      %v1580 = vunpack.c.l.b16 %v1548
      %v1581 = vunpack.c.l.b16 %v1549
      %v1582 = vpack.c.b16 %v1567, %v1566
      %v1583 = vpack.c.b16 %v1569, %v1568
      %v1584 = vpack.c.b16 %v1571, %v1570
      %v1585 = vpack.c.b16 %v1573, %v1572
      %v1586 = vpack.c.b16 %v1575, %v1574
      %v1587 = vpack.c.b16 %v1577, %v1576
      %v1588 = vpack.c.b16 %v1579, %v1578
      %v1589 = vpack.c.b16 %v1581, %v1580
      %1598 = vmatprep.subr.bf16.mxu0 0
      %1599 = vmatpush1.bf16.msra.mxu0 %v1589
      %1600 = vmatprep.subr.bf16.mxu0 0
      %1601 = vmatpush1.bf16.msra.mxu0 %v1588
      %1602 = vmatprep.subr.bf16.mxu0 0
      %1603 = vmatpush1.bf16.msra.mxu0 %v1587
      %1604 = vmatprep.subr.bf16.mxu0 0
      %1605 = vmatpush1.bf16.msra.mxu0 %v1586
      %1606 = vmatprep.subr.bf16.mxu0 0
      %1607 = vmatpush1.bf16.msra.mxu0 %v1585
      %1608 = vmatprep.subr.bf16.mxu0 0
      %1609 = vmatpush1.bf16.msra.mxu0 %v1584
      %1610 = vmatprep.subr.bf16.mxu0 0
      %1611 = vmatpush1.bf16.msra.mxu0 %v1583
      %1612 = vmatprep.subr.bf16.mxu0 0
      %1613 = vmatpush1.bf16.msra.mxu0 %v1582
      %1614 = vmatprep.subr.bf16.mxu0 0
      %1615 = vmatpush2.bf16.msra.mxu0 0
      %1616 = vmatprep.subr.bf16.mxu0 0
      %1617 = vmatpush2.bf16.msra.mxu0 0
      %1618 = vmatprep.subr.bf16.mxu0 0
      %1619 = vmatpush2.bf16.msra.mxu0 0
      %1620 = vmatprep.subr.bf16.mxu0 0
      %1621 = vmatpush2.bf16.msra.mxu0 0
      %1622 = vmatprep.subr.bf16.mxu0 0
      %1623 = vmatpush2.bf16.msra.mxu0 0
      %1624 = vmatprep.subr.bf16.mxu0 0
      %1625 = vmatpush2.bf16.msra.mxu0 0
      %1626 = vmatprep.subr.bf16.mxu0 0
      %1627 = vmatpush2.bf16.msra.mxu0 0
      %1628 = vmatprep.subr.bf16.mxu0 0
      %1629 = vmatpush2.bf16.msra.mxu0 0
      %1630 = vmatprep.mubr.bf16.mxu0 0
      %1631 = vmatmul.mubr.bf16.gmra.mxu0 %v1293
      %v1632 = vpop.f32.mrf.mxu0
      %v1633 = vadd.f32 0.0, %v1632
      %v1634 = vpop.f32.mrf.mxu0
      %v1635 = vpop.f32.mrf.mxu0
      %v1636 = vadd.f32 0.0, %v1635
      %v1637 = vpop.f32.mrf.mxu0
      %1638 = vmatprep.mubr.bf16.mxu0 0
      %1639 = vmatmul.mubr.bf16.gmra.mxu0 %v1294
      %v1640 = vpop.f32.mrf.mxu0
      %v1641 = vadd.f32 0.0, %v1640
      %v1642 = vpop.f32.mrf.mxu0
      %v1643 = vpop.f32.mrf.mxu0
      %v1644 = vadd.f32 0.0, %v1643
      %v1645 = vpop.f32.mrf.mxu0
      %1646 = vmatprep.mubr.bf16.mxu0 0
      %1647 = vmatmul.mubr.bf16.gmra.mxu0 %v1295
      %v1648 = vpop.f32.mrf.mxu0
      %v1649 = vadd.f32 0.0, %v1648
      %v1650 = vpop.f32.mrf.mxu0
      %v1651 = vpop.f32.mrf.mxu0
      %v1652 = vadd.f32 0.0, %v1651
      %v1653 = vpop.f32.mrf.mxu0
      %1654 = vmatprep.mubr.bf16.mxu0 0
      %1655 = vmatmul.mubr.bf16.gmra.mxu0 %v1296
      %v1656 = vpop.f32.mrf.mxu0
      %v1657 = vadd.f32 0.0, %v1656
      %v1658 = vpop.f32.mrf.mxu0
      %v1659 = vpop.f32.mrf.mxu0
      %v1660 = vadd.f32 0.0, %v1659
      %v1661 = vpop.f32.mrf.mxu0
      %1662 = vmatprep.mubr.bf16.mxu0 0
      %1663 = vmatmul.mubr.bf16.gmra.mxu0 %v1297
      %v1664 = vpop.f32.mrf.mxu0
      %v1665 = vadd.f32 0.0, %v1664
      %v1666 = vpop.f32.mrf.mxu0
      %v1667 = vpop.f32.mrf.mxu0
      %v1668 = vadd.f32 0.0, %v1667
      %v1669 = vpop.f32.mrf.mxu0
      %1670 = vmatprep.mubr.bf16.mxu0 0
      %1671 = vmatmul.mubr.bf16.gmra.mxu0 %v1298
      %v1672 = vpop.f32.mrf.mxu0
      %v1673 = vadd.f32 0.0, %v1672
      %v1674 = vpop.f32.mrf.mxu0
      %v1675 = vpop.f32.mrf.mxu0
      %v1676 = vadd.f32 0.0, %v1675
      %v1677 = vpop.f32.mrf.mxu0
      %1678 = vmatprep.mubr.bf16.mxu0 0
      %1679 = vmatmul.mubr.bf16.gmra.mxu0 %v1299
      %v1680 = vpop.f32.mrf.mxu0
      %v1681 = vadd.f32 0.0, %v1680
      %v1682 = vpop.f32.mrf.mxu0
      %v1683 = vpop.f32.mrf.mxu0
      %v1684 = vadd.f32 0.0, %v1683
      %v1685 = vpop.f32.mrf.mxu0
      %1686 = vmatprep.mubr.bf16.mxu0 0
      %1687 = vmatmul.mubr.bf16.gmra.mxu0 %v1300
      %v1688 = vpop.f32.mrf.mxu0
      %v1689 = vadd.f32 0.0, %v1688
      %v1690 = vpop.f32.mrf.mxu0
      %v1691 = vpop.f32.mrf.mxu0
      %v1692 = vadd.f32 0.0, %v1691
      %v1693 = vpop.f32.mrf.mxu0
      %1694 = vmatprep.mubr.bf16.mxu0 0
      %1695 = vmatmul.mubr.bf16.gmra.mxu0 %v1301
      %v1696 = vpop.f32.mrf.mxu0
      %v1697 = vadd.f32 0.0, %v1696
      %v1698 = vpop.f32.mrf.mxu0
      %v1699 = vpop.f32.mrf.mxu0
      %v1700 = vadd.f32 0.0, %v1699
      %v1701 = vpop.f32.mrf.mxu0
      %1702 = vmatprep.mubr.bf16.mxu0 0
      %1703 = vmatmul.mubr.bf16.gmra.mxu0 %v1302
      %v1704 = vpop.f32.mrf.mxu0
      %v1705 = vadd.f32 0.0, %v1704
      %v1706 = vpop.f32.mrf.mxu0
      %v1707 = vpop.f32.mrf.mxu0
      %v1708 = vadd.f32 0.0, %v1707
      %v1709 = vpop.f32.mrf.mxu0
      %1710 = vmatprep.mubr.bf16.mxu0 0
      %1711 = vmatmul.mubr.bf16.gmra.mxu0 %v1303
      %v1712 = vpop.f32.mrf.mxu0
      %v1713 = vadd.f32 0.0, %v1712
      %v1714 = vpop.f32.mrf.mxu0
      %v1715 = vpop.f32.mrf.mxu0
      %v1716 = vadd.f32 0.0, %v1715
      %v1717 = vpop.f32.mrf.mxu0
      %1718 = vmatprep.mubr.bf16.mxu0 0
      %1719 = vmatmul.mubr.bf16.gmra.mxu0 %v1304
      %v1720 = vpop.f32.mrf.mxu0
      %v1721 = vadd.f32 0.0, %v1720
      %v1722 = vpop.f32.mrf.mxu0
      %v1723 = vpop.f32.mrf.mxu0
      %v1724 = vadd.f32 0.0, %v1723
      %v1725 = vpop.f32.mrf.mxu0
      %1726 = vmatprep.mubr.bf16.mxu0 0
      %1727 = vmatmul.mubr.bf16.gmra.mxu0 %v1305
      %v1728 = vpop.f32.mrf.mxu0
      %v1729 = vadd.f32 0.0, %v1728
      %v1730 = vpop.f32.mrf.mxu0
      %v1731 = vpop.f32.mrf.mxu0
      %v1732 = vadd.f32 0.0, %v1731
      %v1733 = vpop.f32.mrf.mxu0
      %1734 = vmatprep.mubr.bf16.mxu0 0
      %1735 = vmatmul.mubr.bf16.gmra.mxu0 %v1306
      %v1736 = vpop.f32.mrf.mxu0
      %v1737 = vadd.f32 0.0, %v1736
      %v1738 = vpop.f32.mrf.mxu0
      %v1739 = vpop.f32.mrf.mxu0
      %v1740 = vadd.f32 0.0, %v1739
      %v1741 = vpop.f32.mrf.mxu0
      %1742 = vmatprep.mubr.bf16.mxu0 0
      %1743 = vmatmul.mubr.bf16.gmra.mxu0 %v1307
      %v1744 = vpop.f32.mrf.mxu0
      %v1745 = vadd.f32 0.0, %v1744
      %v1746 = vpop.f32.mrf.mxu0
      %v1747 = vpop.f32.mrf.mxu0
      %v1748 = vadd.f32 0.0, %v1747
      %v1749 = vpop.f32.mrf.mxu0
      %1750 = vmatprep.mubr.bf16.mxu0 0
      %1751 = vmatmul.mubr.bf16.gmra.mxu0 %v1308
      %v1752 = vpop.f32.mrf.mxu0
      %v1753 = vadd.f32 0.0, %v1752
      %v1754 = vpop.f32.mrf.mxu0
      %v1755 = vpop.f32.mrf.mxu0
      %v1756 = vadd.f32 0.0, %v1755
      %v1757 = vpop.f32.mrf.mxu0
      %1758 = vdwg.mxu0
      %v1759 = vld [vmem:[%s3 + $0x80] sm:$0xf]
      %v1760 = vld [vmem:[%s3 + $0x84] sm:$0xf]
      %v1761 = vld [vmem:[%s3 + $0x88] sm:$0xf]
      %v1762 = vld [vmem:[%s3 + $0x8c] sm:$0xf]
      %v1763 = vld [vmem:[%s3 + $0x90] sm:$0xf]
      %v1764 = vld [vmem:[%s3 + $0x94] sm:$0xf]
      %v1765 = vld [vmem:[%s3 + $0x98] sm:$0xf]
      %v1766 = vld [vmem:[%s3 + $0x9c] sm:$0xf]
      %v1767 = vld [vmem:[%s3 + $0xa0] sm:$0xf]
      %v1768 = vld [vmem:[%s3 + $0xa4] sm:$0xf]
      %v1769 = vld [vmem:[%s3 + $0xa8] sm:$0xf]
      %v1770 = vld [vmem:[%s3 + $0xac] sm:$0xf]
      %v1771 = vld [vmem:[%s3 + $0xb0] sm:$0xf]
      %v1772 = vld [vmem:[%s3 + $0xb4] sm:$0xf]
      %v1773 = vld [vmem:[%s3 + $0xb8] sm:$0xf]
      %v1774 = vld [vmem:[%s3 + $0xbc] sm:$0xf]
      %v1791 = vunpack.c.l.b16 %v1759
      %v1792 = vunpack.c.l.b16 %v1760
      %v1793 = vunpack.c.l.b16 %v1761
      %v1794 = vunpack.c.l.b16 %v1762
      %v1795 = vunpack.c.l.b16 %v1763
      %v1796 = vunpack.c.l.b16 %v1764
      %v1797 = vunpack.c.l.b16 %v1765
      %v1798 = vunpack.c.l.b16 %v1766
      %v1799 = vunpack.c.l.b16 %v1767
      %v1800 = vunpack.c.l.b16 %v1768
      %v1801 = vunpack.c.l.b16 %v1769
      %v1802 = vunpack.c.l.b16 %v1770
      %v1803 = vunpack.c.l.b16 %v1771
      %v1804 = vunpack.c.l.b16 %v1772
      %v1805 = vunpack.c.l.b16 %v1773
      %v1806 = vunpack.c.l.b16 %v1774
      %v1807 = vpack.c.b16 %v1792, %v1791
      %v1808 = vpack.c.b16 %v1794, %v1793
      %v1809 = vpack.c.b16 %v1796, %v1795
      %v1810 = vpack.c.b16 %v1798, %v1797
      %v1811 = vpack.c.b16 %v1800, %v1799
      %v1812 = vpack.c.b16 %v1802, %v1801
      %v1813 = vpack.c.b16 %v1804, %v1803
      %v1814 = vpack.c.b16 %v1806, %v1805
      %1823 = vmatprep.subr.bf16.mxu0 0
      %1824 = vmatpush1.bf16.msra.mxu0 %v1814
      %1825 = vmatprep.subr.bf16.mxu0 0
      %1826 = vmatpush1.bf16.msra.mxu0 %v1813
      %1827 = vmatprep.subr.bf16.mxu0 0
      %1828 = vmatpush1.bf16.msra.mxu0 %v1812
      %1829 = vmatprep.subr.bf16.mxu0 0
      %1830 = vmatpush1.bf16.msra.mxu0 %v1811
      %1831 = vmatprep.subr.bf16.mxu0 0
      %1832 = vmatpush1.bf16.msra.mxu0 %v1810
      %1833 = vmatprep.subr.bf16.mxu0 0
      %1834 = vmatpush1.bf16.msra.mxu0 %v1809
      %1835 = vmatprep.subr.bf16.mxu0 0
      %1836 = vmatpush1.bf16.msra.mxu0 %v1808
      %1837 = vmatprep.subr.bf16.mxu0 0
      %1838 = vmatpush1.bf16.msra.mxu0 %v1807
      %1839 = vmatprep.subr.bf16.mxu0 0
      %1840 = vmatpush2.bf16.msra.mxu0 0
      %1841 = vmatprep.subr.bf16.mxu0 0
      %1842 = vmatpush2.bf16.msra.mxu0 0
      %1843 = vmatprep.subr.bf16.mxu0 0
      %1844 = vmatpush2.bf16.msra.mxu0 0
      %1845 = vmatprep.subr.bf16.mxu0 0
      %1846 = vmatpush2.bf16.msra.mxu0 0
      %1847 = vmatprep.subr.bf16.mxu0 0
      %1848 = vmatpush2.bf16.msra.mxu0 0
      %1849 = vmatprep.subr.bf16.mxu0 0
      %1850 = vmatpush2.bf16.msra.mxu0 0
      %1851 = vmatprep.subr.bf16.mxu0 0
      %1852 = vmatpush2.bf16.msra.mxu0 0
      %1853 = vmatprep.subr.bf16.mxu0 0
      %1854 = vmatpush2.bf16.msra.mxu0 0
      %1855 = vmatprep.mubr.bf16.mxu0 0
      %1856 = vmatmul.mubr.bf16.gmra.mxu0 %v1293
      %v1857 = vpop.f32.mrf.mxu0
      %v1858 = vadd.f32 0.0, %v1857
      %v1859 = vpop.f32.mrf.mxu0
      %v1860 = vpop.f32.mrf.mxu0
      %v1861 = vadd.f32 0.0, %v1860
      %v1862 = vpop.f32.mrf.mxu0
      %1863 = vmatprep.mubr.bf16.mxu0 0
      %1864 = vmatmul.mubr.bf16.gmra.mxu0 %v1294
      %v1865 = vpop.f32.mrf.mxu0
      %v1866 = vadd.f32 0.0, %v1865
      %v1867 = vpop.f32.mrf.mxu0
      %v1868 = vpop.f32.mrf.mxu0
      %v1869 = vadd.f32 0.0, %v1868
      %v1870 = vpop.f32.mrf.mxu0
      %1871 = vmatprep.mubr.bf16.mxu0 0
      %1872 = vmatmul.mubr.bf16.gmra.mxu0 %v1295
      %v1873 = vpop.f32.mrf.mxu0
      %v1874 = vadd.f32 0.0, %v1873
      %v1875 = vpop.f32.mrf.mxu0
      %v1876 = vpop.f32.mrf.mxu0
      %v1877 = vadd.f32 0.0, %v1876
      %v1878 = vpop.f32.mrf.mxu0
      %1879 = vmatprep.mubr.bf16.mxu0 0
      %1880 = vmatmul.mubr.bf16.gmra.mxu0 %v1296
      %v1881 = vpop.f32.mrf.mxu0
      %v1882 = vadd.f32 0.0, %v1881
      %v1883 = vpop.f32.mrf.mxu0
      %v1884 = vpop.f32.mrf.mxu0
      %v1885 = vadd.f32 0.0, %v1884
      %v1886 = vpop.f32.mrf.mxu0
      %1887 = vmatprep.mubr.bf16.mxu0 0
      %1888 = vmatmul.mubr.bf16.gmra.mxu0 %v1297
      %v1889 = vpop.f32.mrf.mxu0
      %v1890 = vadd.f32 0.0, %v1889
      %v1891 = vpop.f32.mrf.mxu0
      %v1892 = vpop.f32.mrf.mxu0
      %v1893 = vadd.f32 0.0, %v1892
      %v1894 = vpop.f32.mrf.mxu0
      %1895 = vmatprep.mubr.bf16.mxu0 0
      %1896 = vmatmul.mubr.bf16.gmra.mxu0 %v1298
      %v1897 = vpop.f32.mrf.mxu0
      %v1898 = vadd.f32 0.0, %v1897
      %v1899 = vpop.f32.mrf.mxu0
      %v1900 = vpop.f32.mrf.mxu0
      %v1901 = vadd.f32 0.0, %v1900
      %v1902 = vpop.f32.mrf.mxu0
      %1903 = vmatprep.mubr.bf16.mxu0 0
      %1904 = vmatmul.mubr.bf16.gmra.mxu0 %v1299
      %v1905 = vpop.f32.mrf.mxu0
      %v1906 = vadd.f32 0.0, %v1905
      %v1907 = vpop.f32.mrf.mxu0
      %v1908 = vpop.f32.mrf.mxu0
      %v1909 = vadd.f32 0.0, %v1908
      %v1910 = vpop.f32.mrf.mxu0
      %1911 = vmatprep.mubr.bf16.mxu0 0
      %1912 = vmatmul.mubr.bf16.gmra.mxu0 %v1300
      %v1913 = vpop.f32.mrf.mxu0
      %v1914 = vadd.f32 0.0, %v1913
      %v1915 = vpop.f32.mrf.mxu0
      %v1916 = vpop.f32.mrf.mxu0
      %v1917 = vadd.f32 0.0, %v1916
      %v1918 = vpop.f32.mrf.mxu0
      %1919 = vmatprep.mubr.bf16.mxu0 0
      %1920 = vmatmul.mubr.bf16.gmra.mxu0 %v1301
      %v1921 = vpop.f32.mrf.mxu0
      %v1922 = vadd.f32 0.0, %v1921
      %v1923 = vpop.f32.mrf.mxu0
      %v1924 = vpop.f32.mrf.mxu0
      %v1925 = vadd.f32 0.0, %v1924
      %v1926 = vpop.f32.mrf.mxu0
      %1927 = vmatprep.mubr.bf16.mxu0 0
      %1928 = vmatmul.mubr.bf16.gmra.mxu0 %v1302
      %v1929 = vpop.f32.mrf.mxu0
      %v1930 = vadd.f32 0.0, %v1929
      %v1931 = vpop.f32.mrf.mxu0
      %v1932 = vpop.f32.mrf.mxu0
      %v1933 = vadd.f32 0.0, %v1932
      %v1934 = vpop.f32.mrf.mxu0
      %1935 = vmatprep.mubr.bf16.mxu0 0
      %1936 = vmatmul.mubr.bf16.gmra.mxu0 %v1303
      %v1937 = vpop.f32.mrf.mxu0
      %v1938 = vadd.f32 0.0, %v1937
      %v1939 = vpop.f32.mrf.mxu0
      %v1940 = vpop.f32.mrf.mxu0
      %v1941 = vadd.f32 0.0, %v1940
      %v1942 = vpop.f32.mrf.mxu0
      %1943 = vmatprep.mubr.bf16.mxu0 0
      %1944 = vmatmul.mubr.bf16.gmra.mxu0 %v1304
      %v1945 = vpop.f32.mrf.mxu0
      %v1946 = vadd.f32 0.0, %v1945
      %v1947 = vpop.f32.mrf.mxu0
      %v1948 = vpop.f32.mrf.mxu0
      %v1949 = vadd.f32 0.0, %v1948
      %v1950 = vpop.f32.mrf.mxu0
      %1951 = vmatprep.mubr.bf16.mxu0 0
      %1952 = vmatmul.mubr.bf16.gmra.mxu0 %v1305
      %v1953 = vpop.f32.mrf.mxu0
      %v1954 = vadd.f32 0.0, %v1953
      %v1955 = vpop.f32.mrf.mxu0
      %v1956 = vpop.f32.mrf.mxu0
      %v1957 = vadd.f32 0.0, %v1956
      %v1958 = vpop.f32.mrf.mxu0
      %1959 = vmatprep.mubr.bf16.mxu0 0
      %1960 = vmatmul.mubr.bf16.gmra.mxu0 %v1306
      %v1961 = vpop.f32.mrf.mxu0
      %v1962 = vadd.f32 0.0, %v1961
      %v1963 = vpop.f32.mrf.mxu0
      %v1964 = vpop.f32.mrf.mxu0
      %v1965 = vadd.f32 0.0, %v1964
      %v1966 = vpop.f32.mrf.mxu0
      %1967 = vmatprep.mubr.bf16.mxu0 0
      %1968 = vmatmul.mubr.bf16.gmra.mxu0 %v1307
      %v1969 = vpop.f32.mrf.mxu0
      %v1970 = vadd.f32 0.0, %v1969
      %v1971 = vpop.f32.mrf.mxu0
      %v1972 = vpop.f32.mrf.mxu0
      %v1973 = vadd.f32 0.0, %v1972
      %v1974 = vpop.f32.mrf.mxu0
      %1975 = vmatprep.mubr.bf16.mxu0 0
      %1976 = vmatmul.mubr.bf16.gmra.mxu0 %v1308
      %v1977 = vpop.f32.mrf.mxu0
      %v1978 = vadd.f32 0.0, %v1977
      %v1979 = vpop.f32.mrf.mxu0
      %v1980 = vpop.f32.mrf.mxu0
      %v1981 = vadd.f32 0.0, %v1980
      %v1982 = vpop.f32.mrf.mxu0
      %1983 = vdwg.mxu0
      %v1984 = vrot.slane %v1408, 7
      %v1985 = vrot.slane %v1411, 7
      %v1986 = vrot.slane %v1416, 7
      %v1987 = vrot.slane %v1419, 7
      %v1988 = vrot.slane %v1424, 7
      %v1989 = vrot.slane %v1427, 7
      %v1990 = vrot.slane %v1432, 7
      %v1991 = vrot.slane %v1435, 7
      %v1992 = vrot.slane %v1440, 7
      %v1993 = vrot.slane %v1443, 7
      %v1994 = vrot.slane %v1448, 7
      %v1995 = vrot.slane %v1451, 7
      %v1996 = vrot.slane %v1456, 7
      %v1997 = vrot.slane %v1459, 7
      %v1998 = vrot.slane %v1464, 7
      %v1999 = vrot.slane %v1467, 7
      %v2000 = vrot.slane %v1472, 7
      %v2001 = vrot.slane %v1475, 7
      %v2002 = vrot.slane %v1480, 7
      %v2003 = vrot.slane %v1483, 7
      %v2004 = vrot.slane %v1488, 7
      %v2005 = vrot.slane %v1491, 7
      %v2006 = vrot.slane %v1496, 7
      %v2007 = vrot.slane %v1499, 7
      %v2008 = vrot.slane %v1504, 7
      %v2009 = vrot.slane %v1507, 7
      %v2010 = vrot.slane %v1512, 7
      %v2011 = vrot.slane %v1515, 7
      %v2012 = vrot.slane %v1520, 7
      %v2013 = vrot.slane %v1523, 7
      %v2014 = vrot.slane %v1528, 7
      %v2015 = vrot.slane %v1531, 7
      %v2016 = vsel %vm996, %v2014, %v2015
      %v2017 = vsel %vm996, %v2013, %v2014
      %v2018 = vsel %vm996, %v2012, %v2013
      %v2019 = vsel %vm996, %v2011, %v2012
      %v2020 = vsel %vm996, %v2010, %v2011
      %v2021 = vsel %vm996, %v2009, %v2010
      %v2022 = vsel %vm996, %v2008, %v2009
      %v2023 = vsel %vm996, %v2007, %v2008
      %v2024 = vsel %vm996, %v2006, %v2007
      %v2025 = vsel %vm996, %v2005, %v2006
      %v2026 = vsel %vm996, %v2004, %v2005
      %v2027 = vsel %vm996, %v2003, %v2004
      %v2028 = vsel %vm996, %v2002, %v2003
      %v2029 = vsel %vm996, %v2001, %v2002
      %v2030 = vsel %vm996, %v2000, %v2001
      %v2031 = vsel %vm996, %v1999, %v2000
      %v2032 = vsel %vm996, %v1998, %v1999
      %v2033 = vsel %vm996, %v1997, %v1998
      %v2034 = vsel %vm996, %v1996, %v1997
      %v2035 = vsel %vm996, %v1995, %v1996
      %v2036 = vsel %vm996, %v1994, %v1995
      %v2037 = vsel %vm996, %v1993, %v1994
      %v2038 = vsel %vm996, %v1992, %v1993
      %v2039 = vsel %vm996, %v1991, %v1992
      %v2040 = vsel %vm996, %v1990, %v1991
      %v2041 = vsel %vm996, %v1989, %v1990
      %v2042 = vsel %vm996, %v1988, %v1989
      %v2043 = vsel %vm996, %v1987, %v1988
      %v2044 = vsel %vm996, %v1986, %v1987
      %v2045 = vsel %vm996, %v1985, %v1986
      %v2046 = vsel %vm996, %v1984, %v1985
      %v2047 = vsel %vm996, %v2015, %v1984
      %v2048 = vsel %vm237, %v2047, 0.0
      %v2049 = vsel %vm238, %v2046, 0.0
      %v2050 = vsel %vm237, %v2045, 0.0
      %v2051 = vsel %vm238, %v2044, 0.0
      %v2052 = vsel %vm237, %v2043, 0.0
      %v2053 = vsel %vm238, %v2042, 0.0
      %v2054 = vsel %vm237, %v2041, 0.0
      %v2055 = vsel %vm238, %v2040, 0.0
      %v2056 = vsel %vm237, %v2039, 0.0
      %v2057 = vsel %vm238, %v2038, 0.0
      %v2058 = vsel %vm237, %v2037, 0.0
      %v2059 = vsel %vm238, %v2036, 0.0
      %v2060 = vsel %vm237, %v2035, 0.0
      %v2061 = vsel %vm238, %v2034, 0.0
      %v2062 = vsel %vm237, %v2033, 0.0
      %v2063 = vsel %vm238, %v2032, 0.0
      %v2064 = vsel %vm237, %v2031, 0.0
      %v2065 = vsel %vm238, %v2030, 0.0
      %v2066 = vsel %vm237, %v2029, 0.0
      %v2067 = vsel %vm238, %v2028, 0.0
      %v2068 = vsel %vm237, %v2027, 0.0
      %v2069 = vsel %vm238, %v2026, 0.0
      %v2070 = vsel %vm237, %v2025, 0.0
      %v2071 = vsel %vm238, %v2024, 0.0
      %v2072 = vsel %vm237, %v2023, 0.0
      %v2073 = vsel %vm238, %v2022, 0.0
      %v2074 = vsel %vm237, %v2021, 0.0
      %v2075 = vsel %vm238, %v2020, 0.0
      %v2076 = vsel %vm237, %v2019, 0.0
      %v2077 = vsel %vm238, %v2018, 0.0
      %v2078 = vsel %vm237, %v2017, 0.0
      %v2079 = vsel %vm238, %v2016, 0.0
      %v2080 = vrot.slane %v1858, 1
      %v2081 = vrot.slane %v1861, 1
      %v2082 = vrot.slane %v1866, 1
      %v2083 = vrot.slane %v1869, 1
      %v2084 = vrot.slane %v1874, 1
      %v2085 = vrot.slane %v1877, 1
      %v2086 = vrot.slane %v1882, 1
      %v2087 = vrot.slane %v1885, 1
      %v2088 = vrot.slane %v1890, 1
      %v2089 = vrot.slane %v1893, 1
      %v2090 = vrot.slane %v1898, 1
      %v2091 = vrot.slane %v1901, 1
      %v2092 = vrot.slane %v1906, 1
      %v2093 = vrot.slane %v1909, 1
      %v2094 = vrot.slane %v1914, 1
      %v2095 = vrot.slane %v1917, 1
      %v2096 = vrot.slane %v1922, 1
      %v2097 = vrot.slane %v1925, 1
      %v2098 = vrot.slane %v1930, 1
      %v2099 = vrot.slane %v1933, 1
      %v2100 = vrot.slane %v1938, 1
      %v2101 = vrot.slane %v1941, 1
      %v2102 = vrot.slane %v1946, 1
      %v2103 = vrot.slane %v1949, 1
      %v2104 = vrot.slane %v1954, 1
      %v2105 = vrot.slane %v1957, 1
      %v2106 = vrot.slane %v1962, 1
      %v2107 = vrot.slane %v1965, 1
      %v2108 = vrot.slane %v1970, 1
      %v2109 = vrot.slane %v1973, 1
      %v2110 = vrot.slane %v1978, 1
      %v2111 = vrot.slane %v1981, 1
      %v2112 = vsel %vm1093, %v2110, %v2111
      %v2113 = vsel %vm1093, %v2109, %v2110
      %v2114 = vsel %vm1093, %v2108, %v2109
      %v2115 = vsel %vm1093, %v2107, %v2108
      %v2116 = vsel %vm1093, %v2106, %v2107
      %v2117 = vsel %vm1093, %v2105, %v2106
      %v2118 = vsel %vm1093, %v2104, %v2105
      %v2119 = vsel %vm1093, %v2103, %v2104
      %v2120 = vsel %vm1093, %v2102, %v2103
      %v2121 = vsel %vm1093, %v2101, %v2102
      %v2122 = vsel %vm1093, %v2100, %v2101
      %v2123 = vsel %vm1093, %v2099, %v2100
      %v2124 = vsel %vm1093, %v2098, %v2099
      %v2125 = vsel %vm1093, %v2097, %v2098
      %v2126 = vsel %vm1093, %v2096, %v2097
      %v2127 = vsel %vm1093, %v2095, %v2096
      %v2128 = vsel %vm1093, %v2094, %v2095
      %v2129 = vsel %vm1093, %v2093, %v2094
      %v2130 = vsel %vm1093, %v2092, %v2093
      %v2131 = vsel %vm1093, %v2091, %v2092
      %v2132 = vsel %vm1093, %v2090, %v2091
      %v2133 = vsel %vm1093, %v2089, %v2090
      %v2134 = vsel %vm1093, %v2088, %v2089
      %v2135 = vsel %vm1093, %v2087, %v2088
      %v2136 = vsel %vm1093, %v2086, %v2087
      %v2137 = vsel %vm1093, %v2085, %v2086
      %v2138 = vsel %vm1093, %v2084, %v2085
      %v2139 = vsel %vm1093, %v2083, %v2084
      %v2140 = vsel %vm1093, %v2082, %v2083
      %v2141 = vsel %vm1093, %v2081, %v2082
      %v2142 = vsel %vm1093, %v2080, %v2081
      %v2143 = vsel %vm1093, %v2111, %v2080
      %v2144 = vsel %vm239, %v2142, 0.0
      %v2145 = vsel %vm240, %v2141, 0.0
      %v2146 = vsel %vm239, %v2140, 0.0
      %v2147 = vsel %vm240, %v2139, 0.0
      %v2148 = vsel %vm239, %v2138, 0.0
      %v2149 = vsel %vm240, %v2137, 0.0
      %v2150 = vsel %vm239, %v2136, 0.0
      %v2151 = vsel %vm240, %v2135, 0.0
      %v2152 = vsel %vm239, %v2134, 0.0
      %v2153 = vsel %vm240, %v2133, 0.0
      %v2154 = vsel %vm239, %v2132, 0.0
      %v2155 = vsel %vm240, %v2131, 0.0
      %v2156 = vsel %vm239, %v2130, 0.0
      %v2157 = vsel %vm240, %v2129, 0.0
      %v2158 = vsel %vm239, %v2128, 0.0
      %v2159 = vsel %vm240, %v2127, 0.0
      %v2160 = vsel %vm239, %v2126, 0.0
      %v2161 = vsel %vm240, %v2125, 0.0
      %v2162 = vsel %vm239, %v2124, 0.0
      %v2163 = vsel %vm240, %v2123, 0.0
      %v2164 = vsel %vm239, %v2122, 0.0
      %v2165 = vsel %vm240, %v2121, 0.0
      %v2166 = vsel %vm239, %v2120, 0.0
      %v2167 = vsel %vm240, %v2119, 0.0
      %v2168 = vsel %vm239, %v2118, 0.0
      %v2169 = vsel %vm240, %v2117, 0.0
      %v2170 = vsel %vm239, %v2116, 0.0
      %v2171 = vsel %vm240, %v2115, 0.0
      %v2172 = vsel %vm239, %v2114, 0.0
      %v2173 = vsel %vm240, %v2113, 0.0
      %v2174 = vsel %vm239, %v2112, 0.0
      %v2175 = vsel %vm240, %v2143, 0.0
      %v2176 = vadd.f32 %v2048, %v1633
      %v2177 = vadd.f32 %v2049, %v1636
      %v2178 = vadd.f32 %v2050, %v1641
      %v2179 = vadd.f32 %v2051, %v1644
      %v2180 = vadd.f32 %v2052, %v1649
      %v2181 = vadd.f32 %v2053, %v1652
      %v2182 = vadd.f32 %v2054, %v1657
      %v2183 = vadd.f32 %v2055, %v1660
      %v2184 = vadd.f32 %v2056, %v1665
      %v2185 = vadd.f32 %v2057, %v1668
      %v2186 = vadd.f32 %v2058, %v1673
      %v2187 = vadd.f32 %v2059, %v1676
      %v2188 = vadd.f32 %v2060, %v1681
      %v2189 = vadd.f32 %v2061, %v1684
      %v2190 = vadd.f32 %v2062, %v1689
      %v2191 = vadd.f32 %v2063, %v1692
      %v2192 = vadd.f32 %v2064, %v1697
      %v2193 = vadd.f32 %v2065, %v1700
      %v2194 = vadd.f32 %v2066, %v1705
      %v2195 = vadd.f32 %v2067, %v1708
      %v2196 = vadd.f32 %v2068, %v1713
      %v2197 = vadd.f32 %v2069, %v1716
      %v2198 = vadd.f32 %v2070, %v1721
      %v2199 = vadd.f32 %v2071, %v1724
      %v2200 = vadd.f32 %v2072, %v1729
      %v2201 = vadd.f32 %v2073, %v1732
      %v2202 = vadd.f32 %v2074, %v1737
      %v2203 = vadd.f32 %v2075, %v1740
      %v2204 = vadd.f32 %v2076, %v1745
      %v2205 = vadd.f32 %v2077, %v1748
      %v2206 = vadd.f32 %v2078, %v1753
      %v2207 = vadd.f32 %v2079, %v1756
      %v2208 = vadd.f32 %v2176, %v2144
      %v2209 = vadd.f32 %v2177, %v2145
      %v2210 = vadd.f32 %v2178, %v2146
      %v2211 = vadd.f32 %v2179, %v2147
      %v2212 = vadd.f32 %v2180, %v2148
      %v2213 = vadd.f32 %v2181, %v2149
      %v2214 = vadd.f32 %v2182, %v2150
      %v2215 = vadd.f32 %v2183, %v2151
      %v2216 = vadd.f32 %v2184, %v2152
      %v2217 = vadd.f32 %v2185, %v2153
      %v2218 = vadd.f32 %v2186, %v2154
      %v2219 = vadd.f32 %v2187, %v2155
      %v2220 = vadd.f32 %v2188, %v2156
      %v2221 = vadd.f32 %v2189, %v2157
      %v2222 = vadd.f32 %v2190, %v2158
      %v2223 = vadd.f32 %v2191, %v2159
      %v2224 = vadd.f32 %v2192, %v2160
      %v2225 = vadd.f32 %v2193, %v2161
      %v2226 = vadd.f32 %v2194, %v2162
      %v2227 = vadd.f32 %v2195, %v2163
      %v2228 = vadd.f32 %v2196, %v2164
      %v2229 = vadd.f32 %v2197, %v2165
      %v2230 = vadd.f32 %v2198, %v2166
      %v2231 = vadd.f32 %v2199, %v2167
      %v2232 = vadd.f32 %v2200, %v2168
      %v2233 = vadd.f32 %v2201, %v2169
      %v2234 = vadd.f32 %v2202, %v2170
      %v2235 = vadd.f32 %v2203, %v2171
      %v2236 = vadd.f32 %v2204, %v2172
      %v2237 = vadd.f32 %v2205, %v2173
      %v2238 = vadd.f32 %v2206, %v2174
      %v2239 = vadd.f32 %v2207, %v2175
      %v2240 = vld [vmem:[%s4] sm:$0x1]
      %v2242 = vlaneseq
      %v2243 = vshrl.u32 %v2242, 7
      %v2244 = vsub.s32 0, %v2243
      %v2245 = vrot.slane %v2240, %v2244
      %v2247 = vadd.f32 %v2208, %v2245
      %v2248 = vadd.f32 %v2209, %v2245
      %v2249 = vadd.f32 %v2210, %v2245
      %v2250 = vadd.f32 %v2211, %v2245
      %v2251 = vadd.f32 %v2212, %v2245
      %v2252 = vadd.f32 %v2213, %v2245
      %v2253 = vadd.f32 %v2214, %v2245
      %v2254 = vadd.f32 %v2215, %v2245
      %v2255 = vadd.f32 %v2216, %v2245
      %v2256 = vadd.f32 %v2217, %v2245
      %v2257 = vadd.f32 %v2218, %v2245
      %v2258 = vadd.f32 %v2219, %v2245
      %v2259 = vadd.f32 %v2220, %v2245
      %v2260 = vadd.f32 %v2221, %v2245
      %v2261 = vadd.f32 %v2222, %v2245
      %v2262 = vadd.f32 %v2223, %v2245
      %v2263 = vadd.f32 %v2224, %v2245
      %v2264 = vadd.f32 %v2225, %v2245
      %v2265 = vadd.f32 %v2226, %v2245
      %v2266 = vadd.f32 %v2227, %v2245
      %v2267 = vadd.f32 %v2228, %v2245
      %v2268 = vadd.f32 %v2229, %v2245
      %v2269 = vadd.f32 %v2230, %v2245
      %v2270 = vadd.f32 %v2231, %v2245
      %v2271 = vadd.f32 %v2232, %v2245
      %v2272 = vadd.f32 %v2233, %v2245
      %v2273 = vadd.f32 %v2234, %v2245
      %v2274 = vadd.f32 %v2235, %v2245
      %v2275 = vadd.f32 %v2236, %v2245
      %v2276 = vadd.f32 %v2237, %v2245
      %v2277 = vadd.f32 %v2238, %v2245
      %v2278 = vadd.f32 %v2239, %v2245
      %v2279 = vadd.f32 %v2247, %v241
      %v2280 = vadd.f32 %v2248, %v242
      %v2281 = vadd.f32 %v2249, %v243
      %v2282 = vadd.f32 %v2250, %v244
      %v2283 = vadd.f32 %v2251, %v245
      %v2284 = vadd.f32 %v2252, %v246
      %v2285 = vadd.f32 %v2253, %v247
      %v2286 = vadd.f32 %v2254, %v248
      %v2287 = vadd.f32 %v2255, %v249
      %v2288 = vadd.f32 %v2256, %v250
      %v2289 = vadd.f32 %v2257, %v251
      %v2290 = vadd.f32 %v2258, %v252
      %v2291 = vadd.f32 %v2259, %v253
      %v2292 = vadd.f32 %v2260, %v254
      %v2293 = vadd.f32 %v2261, %v255
      %v2294 = vadd.f32 %v2262, %v256
      %v2295 = vadd.f32 %v2263, %v257
      %v2296 = vadd.f32 %v2264, %v258
      %v2297 = vadd.f32 %v2265, %v259
      %v2298 = vadd.f32 %v2266, %v260
      %v2299 = vadd.f32 %v2267, %v261
      %v2300 = vadd.f32 %v2268, %v262
      %v2301 = vadd.f32 %v2269, %v263
      %v2302 = vadd.f32 %v2270, %v264
      %v2303 = vadd.f32 %v2271, %v265
      %v2304 = vadd.f32 %v2272, %v266
      %v2305 = vadd.f32 %v2273, %v267
      %v2306 = vadd.f32 %v2274, %v268
      %v2307 = vadd.f32 %v2275, %v269
      %v2308 = vadd.f32 %v2276, %v270
      %v2309 = vadd.f32 %v2277, %v271
      %v2310 = vadd.f32 %v2278, %v272
      %v2311 = vmax.f32 %v2279, 0.0
      %v2312 = vmax.f32 %v2280, 0.0
      %v2313 = vmax.f32 %v2281, 0.0
      %v2314 = vmax.f32 %v2282, 0.0
      %v2315 = vmax.f32 %v2283, 0.0
      %v2316 = vmax.f32 %v2284, 0.0
      %v2317 = vmax.f32 %v2285, 0.0
      %v2318 = vmax.f32 %v2286, 0.0
      %v2319 = vmax.f32 %v2287, 0.0
      %v2320 = vmax.f32 %v2288, 0.0
      %v2321 = vmax.f32 %v2289, 0.0
      %v2322 = vmax.f32 %v2290, 0.0
      %v2323 = vmax.f32 %v2291, 0.0
      %v2324 = vmax.f32 %v2292, 0.0
      %v2325 = vmax.f32 %v2293, 0.0
      %v2326 = vmax.f32 %v2294, 0.0
      %v2327 = vmax.f32 %v2295, 0.0
      %v2328 = vmax.f32 %v2296, 0.0
      %v2329 = vmax.f32 %v2297, 0.0
      %v2330 = vmax.f32 %v2298, 0.0
      %v2331 = vmax.f32 %v2299, 0.0
      %v2332 = vmax.f32 %v2300, 0.0
      %v2333 = vmax.f32 %v2301, 0.0
      %v2334 = vmax.f32 %v2302, 0.0
      %v2335 = vmax.f32 %v2303, 0.0
      %v2336 = vmax.f32 %v2304, 0.0
      %v2337 = vmax.f32 %v2305, 0.0
      %v2338 = vmax.f32 %v2306, 0.0
      %v2339 = vmax.f32 %v2307, 0.0
      %v2340 = vmax.f32 %v2308, 0.0
      %v2341 = vmax.f32 %v2309, 0.0
      %v2342 = vmax.f32 %v2310, 0.0
      %2343 = vst [vmem:[%s231] sm:$0xff] %v2311
      %2344 = vst [vmem:[%s231 + $0x8] sm:$0xff] %v2312
      %2345 = vst [vmem:[%s231 + $0x10] sm:$0xff] %v2313
      %2346 = vst [vmem:[%s231 + $0x18] sm:$0xff] %v2314
      %2347 = vst [vmem:[%s231 + $0x20] sm:$0xff] %v2315
      %2348 = vst [vmem:[%s231 + $0x28] sm:$0xff] %v2316
      %2349 = vst [vmem:[%s231 + $0x30] sm:$0xff] %v2317
      %2350 = vst [vmem:[%s231 + $0x38] sm:$0xff] %v2318
      %2351 = vst [vmem:[%s231 + $0x40] sm:$0xff] %v2319
      %2352 = vst [vmem:[%s231 + $0x48] sm:$0xff] %v2320
      %2353 = vst [vmem:[%s231 + $0x50] sm:$0xff] %v2321
      %2354 = vst [vmem:[%s231 + $0x58] sm:$0xff] %v2322
      %2355 = vst [vmem:[%s231 + $0x60] sm:$0xff] %v2323
      %2356 = vst [vmem:[%s231 + $0x68] sm:$0xff] %v2324
      %2357 = vst [vmem:[%s231 + $0x70] sm:$0xff] %v2325
      %2358 = vst [vmem:[%s231 + $0x78] sm:$0xff] %v2326
      %2359 = vst [vmem:[%s231 + $0x80] sm:$0xff] %v2327
      %2360 = vst [vmem:[%s231 + $0x88] sm:$0xff] %v2328
      %2361 = vst [vmem:[%s231 + $0x90] sm:$0xff] %v2329
      %2362 = vst [vmem:[%s231 + $0x98] sm:$0xff] %v2330
      %2363 = vst [vmem:[%s231 + $0xa0] sm:$0xff] %v2331
      %2364 = vst [vmem:[%s231 + $0xa8] sm:$0xff] %v2332
      %2365 = vst [vmem:[%s231 + $0xb0] sm:$0xff] %v2333
      %2366 = vst [vmem:[%s231 + $0xb8] sm:$0xff] %v2334
      %2367 = vst [vmem:[%s231 + $0xc0] sm:$0xff] %v2335
      %2368 = vst [vmem:[%s231 + $0xc8] sm:$0xff] %v2336
      %2369 = vst [vmem:[%s231 + $0xd0] sm:$0xff] %v2337
      %2370 = vst [vmem:[%s231 + $0xd8] sm:$0xff] %v2338
      %2371 = vst [vmem:[%s231 + $0xe0] sm:$0xff] %v2339
      %2372 = vst [vmem:[%s231 + $0xe8] sm:$0xff] %v2340
      %2373 = vst [vmem:[%s231 + $0xf0] sm:$0xff] %v2341
      %2374 = vst [vmem:[%s231 + $0xf8] sm:$0xff] %v2342
      %s2375 = smul.u32 16, %s16
      %p2376 = scmp.lt.s32.totalorder %s2375, 31
      %s2377 = scalar_select %p2376, %s2375, 31
      %s2378 = smul.addr %s2377, 2
      %s2379 = smul.addr %s2378, 8
      %s2380 = scalar_lea.vmem %s5, %s2379
      // Predicated region
      $region41: #{basic_block_forward.1} parent=39 // pred_check
        %p2381 = pneg %p144
      $region42: #{basic_block_forward.1} parent=39 // pred_check_branch
        %2383 = sbr.rel (%p2381) target = $region44
      $region43: #{basic_block_forward.1} parent=39 // pred_region
        %s2384 = smul.u32 16, %s16
      $region44: #{basic_block_forward.1} parent=39 // pred_fallthru
        _
    $region40: #{basic_block_forward.1} parent=5 // pred_fallthru
      _
    %p2385 = scmp.le.s32.totalorder 2, %s11
    // Predicated region
    $region45: #{basic_block_forward.1} parent=5 // pred_check
      %p2386 = pneg %p2385
    $region46: #{basic_block_forward.1} parent=5 // pred_check_branch
      %2388 = sbr.rel (%p2386) target = $region48
    $region47: #{basic_block_forward.1} parent=5 // pred_region
      %s2389 = ssub.s32 %s11, 2
      // Predicated region
      $region49: #{basic_block_forward.1} parent=47 // pred_check
        %p2390 = pneg %p150
      $region50: #{basic_block_forward.1} parent=47 // pred_check_branch
        %2392 = sbr.rel (%p2390) target = $region52
      $region51: #{basic_block_forward.1} parent=47 // pred_region
        %s2393 = smul.u32 16, %s17
        %p2394 = scmp.lt.s32.totalorder %s2393, 31
        %s2395 = scalar_select %p2394, %s2393, 31
        %s2396 = smul.addr %s2395, 2
        %s2397 = smul.addr %s2396, 8
        %s2398 = scalar_lea.vmem %s5, %s2397
      $region52: #{basic_block_forward.1} parent=47 // pred_fallthru
        _
    $region48: #{basic_block_forward.1} parent=5 // pred_fallthru
      _
  $region6: #{basic_block_forward.1} parent=0 // loop_footer
    %s15 = sadd.s32 1, %s11
  $region7: #{basic_block_forward.1} parent=0 // loop_footer_branch
    %10 = sbr.rel target = $region3
  $region8: #{basic_block_forward.1} parent=0 // loop_exit
    _

</llo_original>
